<compile_context>
chip_gen: v6e
topology: v6e:2x2x1
jax: 0.10.0
libtpu: 0.0.40
codegen_flags: <defaults>
</compile_context>

<pallas_src>
import functools
import math

import jax
import jax.numpy as jnp
from jax import lax
from jax.experimental import pallas as pl
from jax.experimental.pallas import tpu as pltpu


# ---------------------------------------------------------------------------
# Fused kernel: all heads + output projection + residual + LayerNorm.
# One grid step handles one (batch, q-tile) pair.
# ---------------------------------------------------------------------------
def _fused_mha_kernel(q_ref, k_ref, v_ref, wq_ref, wk_ref, wv_ref,
                      pw_ref, pb_ref, g_ref, beta_ref,
                      out_ref, attn_ref, *, n_heads, d_k, d_v, eps):
    q = q_ref[0]                                   # (tq, d_model) f32 (also residual)
    k = k_ref[0]                                   # (Lk, d_model) bf16
    v = v_ref[0]                                   # (Lk, d_model) bf16
    tq, d_model = q.shape

    # All-head projections: heads packed on the lane axis -> three wide MXU matmuls.
    # (1/sqrt(d_k) already folded into wq in the wrapper.)
    q_bf = q.astype(jnp.bfloat16)
    q_s = jnp.dot(q_bf, wq_ref[...], preferred_element_type=jnp.float32)   # (tq, H*d_k)
    k_s = jnp.dot(k,    wk_ref[...], preferred_element_type=jnp.float32)   # (Lk, H*d_k)
    v_s = jnp.dot(v,    wv_ref[...], preferred_element_type=jnp.float32)   # (Lk, H*d_v)

    # Whole-array casts hoisted out of the head loop (3 casts instead of 3*H).
    q_sb = q_s.astype(jnp.bfloat16)
    k_sb = k_s.astype(jnp.bfloat16)
    v_sb = v_s.astype(jnp.bfloat16)

    dn_nt = (((1,), (1,)), ((), ()))               # contract last dims ('nt' -> no .T)

    # Accumulate the output projection head-by-head (no lane-axis concat of ctx).
    proj = jnp.zeros((tq, d_model), jnp.float32)
    for h in range(n_heads):                       # static unrolled loop over heads
        q_h = q_sb[:, h * d_k:(h + 1) * d_k]       # (tq, d_k)
        k_h = k_sb[:, h * d_k:(h + 1) * d_k]       # (Lk, d_k)
        v_h = v_sb[:, h * d_v:(h + 1) * d_v]       # (Lk, d_v)

        logits = lax.dot_general(q_h, k_h, dn_nt,
                                 preferred_element_type=jnp.float32)       # (tq, Lk)
        # TODO(synk): attn_mask (masked_fill with -inf) not wired; example uses attn_mask=None.
        m = jnp.max(logits, axis=-1, keepdims=True)
        e = jnp.exp(logits - m)
        p = e * pl.reciprocal(jnp.sum(e, axis=-1, keepdims=True), approx=False)
        p_bf = p.astype(jnp.bfloat16)

        # Same bf16 probabilities are returned AND used for the PV matmul
        # (consistent output vs. returned attn; bf16 store halves the writeback).
        attn_ref[h, 0] = p_bf
        # attention dropout: eval mode -> identity

        ctx_h = jnp.dot(p_bf, v_h, preferred_element_type=jnp.float32)     # (tq, d_v)
        proj = proj + jnp.dot(ctx_h.astype(jnp.bfloat16),
                              pw_ref[h * d_v:(h + 1) * d_v, :],
                              preferred_element_type=jnp.float32)          # (tq, d_model)

    # Output-projection bias + residual; output dropout: eval mode -> identity.
    z = q + proj + pb_ref[...]

    # Custom LayerNormalization: torch.std is unbiased (divide by D-1), eps added to std.
    mean = jnp.mean(z, axis=-1, keepdims=True)
    centered = z - mean
    var = jnp.sum(centered * centered, axis=-1, keepdims=True) / (d_model - 1)
    inv_std = pl.reciprocal(jnp.sqrt(var) + eps, approx=False)
    out_ref[...] = (g_ref[...] * (centered * inv_std) + beta_ref[...])[None]


# ---------------------------------------------------------------------------
# Wrapper
# ---------------------------------------------------------------------------
def multi_head_attention(q, k, v, w_q, w_k, w_v, proj_w, proj_b, gamma, beta,
                         *, eps=1e-3):
    B, Lq, d_model = q.shape
    Lk = k.shape[1]
    H, _, d_k = w_q.shape
    d_v = w_v.shape[-1]
    scale = 1.0 / math.sqrt(d_k)

    # Query-length tiling: bounds per-step VMEM to O(H*tq*Lk) and creates a
    # second parallel grid axis (keeps both v7x TCs busy even when B is 1-2).
    if Lq % 256 == 0:
        tq = 256
    elif Lq % 128 == 0:
        tq = 128
    else:
        tq = Lq                                    # small / toy sequence lengths
    n_q = Lq // tq

    # Pack per-head weights on the lane axis: (H, d_model, d) -> (d_model, H*d), bf16.
    # Fold the softmax scale into w_q (one-time repack, removes H VPU muls per step).
    wq_p = (jnp.transpose(w_q, (1, 0, 2)).reshape(d_model, H * d_k)
            * scale).astype(jnp.bfloat16)
    wk_p = jnp.transpose(w_k, (1, 0, 2)).reshape(d_model, H * d_k).astype(jnp.bfloat16)
    wv_p = jnp.transpose(w_v, (1, 0, 2)).reshape(d_model, H * d_v).astype(jnp.bfloat16)
    pw_t = proj_w.T.astype(jnp.bfloat16)           # (H*d_v, d_model): pre-transposed

    out, attn4 = pl.pallas_call(
        functools.partial(_fused_mha_kernel, n_heads=H, d_k=d_k, d_v=d_v, eps=eps),
        grid=(B, n_q),
        in_specs=[
            pl.BlockSpec((1, tq, d_model), lambda b, qi: (b, qi, 0)),   # q (f32, residual)
            pl.BlockSpec((1, Lk, d_model), lambda b, qi: (b, 0, 0)),    # k (bf16)
            pl.BlockSpec((1, Lk, d_model), lambda b, qi: (b, 0, 0)),    # v (bf16)
            pl.BlockSpec((d_model, H * d_k), lambda b, qi: (0, 0)),     # packed+scaled w_q
            pl.BlockSpec((d_model, H * d_k), lambda b, qi: (0, 0)),     # packed w_k
            pl.BlockSpec((d_model, H * d_v), lambda b, qi: (0, 0)),     # packed w_v
            pl.BlockSpec((H * d_v, d_model), lambda b, qi: (0, 0)),     # proj_w.T
            pl.BlockSpec((1, d_model), lambda b, qi: (0, 0)),           # proj bias
            pl.BlockSpec((1, d_model), lambda b, qi: (0, 0)),           # gamma
            pl.BlockSpec((1, d_model), lambda b, qi: (0, 0)),           # beta
        ],
        out_specs=(
            pl.BlockSpec((1, tq, d_model), lambda b, qi: (b, qi, 0)),       # final output
            pl.BlockSpec((H, 1, tq, Lk), lambda b, qi: (0, b, qi, 0)),       # attn probs (bf16)
        ),
        out_shape=(
            jax.ShapeDtypeStruct((B, Lq, d_model), jnp.float32),
            jax.ShapeDtypeStruct((H, B, Lq, Lk), jnp.bfloat16),
        ),
        compiler_params=pltpu.CompilerParams(
            dimension_semantics=("parallel", "parallel"),
            vmem_limit_bytes=48 * 1024 * 1024,      # fits v7x 64 MiB with headroom
        ),
    )(q,
      k.astype(jnp.bfloat16), v.astype(jnp.bfloat16),
      wq_p, wk_p, wv_p, pw_t,
      proj_b.reshape(1, d_model),
      gamma.reshape(1, d_model), beta.reshape(1, d_model))

    # Torch layout: attn is (n_heads * b_size, Lq, Lk) indexed h*B + b.
    # (H, B, Lq, Lk) -> contiguous reshape, no transpose needed.
    attn = attn4.reshape(H * B, Lq, Lk)
    return out, attn


if __name__ == "__main__":
    # Module hyper-params (small, consistent with the PyTorch __init__).
    B, L = 2, 8
    d_model, n_heads, d_k, d_v = 32, 4, 8, 8

    key = jax.random.PRNGKey(0)
    kq, kk, kv, kwq, kwk, kwv, kpw, kpb = jax.random.split(key, 8)

    q = jax.random.normal(kq, (B, L, d_model), jnp.float32)
    k = jax.random.normal(kk, (B, L, d_model), jnp.float32)
    v = jax.random.normal(kv, (B, L, d_model), jnp.float32)

    # Deterministic synthetic parameter init (xavier-like for head projections).
    xav = math.sqrt(2.0 / (d_model + d_k))
    w_q = jax.random.normal(kwq, (n_heads, d_model, d_k), jnp.float32) * xav
    w_k = jax.random.normal(kwk, (n_heads, d_model, d_k), jnp.float32) * xav
    w_v = jax.random.normal(kwv, (n_heads, d_model, d_v), jnp.float32) * xav

    proj_w = jax.random.normal(kpw, (d_model, n_heads * d_v), jnp.float32) * (
        1.0 / math.sqrt(n_heads * d_v))
    proj_b = jax.random.uniform(kpb, (d_model,), jnp.float32,
                                -1.0 / math.sqrt(n_heads * d_v),
                                1.0 / math.sqrt(n_heads * d_v))
    gamma = jnp.ones((d_model,), jnp.float32)
    beta = jnp.zeros((d_model,), jnp.float32)

    out, attn = multi_head_attention(q, k, v, w_q, w_k, w_v,
                                     proj_w, proj_b, gamma, beta, eps=1e-3)
    jax.block_until_ready((out, attn))
    assert out.shape == (B, L, d_model)
    assert attn.shape == (n_heads * B, L, L)
    print("KERNEL_OK")
</pallas_src>

<mosaic_0001>
module attributes {stable_mosaic.version = 11 : i64} {
  func.func @_fused_mha_kernel(%arg0: i32, %arg1: i32, %arg2: memref<1x8x32xf32, #tpu.memory_space<vmem>>, %arg3: memref<1x8x32xbf16, #tpu.memory_space<vmem>>, %arg4: memref<1x8x32xbf16, #tpu.memory_space<vmem>>, %arg5: memref<32x32xbf16, #tpu.memory_space<vmem>>, %arg6: memref<32x32xbf16, #tpu.memory_space<vmem>>, %arg7: memref<32x32xbf16, #tpu.memory_space<vmem>>, %arg8: memref<32x32xbf16, #tpu.memory_space<vmem>>, %arg9: memref<1x32xf32, #tpu.memory_space<vmem>>, %arg10: memref<1x32xf32, #tpu.memory_space<vmem>>, %arg11: memref<1x32xf32, #tpu.memory_space<vmem>>, %arg12: memref<1x8x32xf32, #tpu.memory_space<vmem>>, %arg13: memref<4x1x8x8xbf16, #tpu.memory_space<vmem>>) attributes {dimension_semantics = [#tpu.dimension_semantics<parallel>, #tpu.dimension_semantics<parallel>], iteration_bounds = array<i64: 2, 1>, scalar_prefetch = 0 : i64, scratch_operands = 0 : i64, tpu.core_type = #tpu.core_type<tc>, window_params = [{transform_indices = @transform_0, window_bounds = array<i64: 1, 8, 32>}, {transform_indices = @transform_1, window_bounds = array<i64: 1, 8, 32>}, {transform_indices = @transform_2, window_bounds = array<i64: 1, 8, 32>}, {pipeline_mode = #tpu.pipeline_mode<synchronous>, transform_indices = @transform_3, window_bounds = array<i64: 32, 32>}, {pipeline_mode = #tpu.pipeline_mode<synchronous>, transform_indices = @transform_4, window_bounds = array<i64: 32, 32>}, {pipeline_mode = #tpu.pipeline_mode<synchronous>, transform_indices = @transform_5, window_bounds = array<i64: 32, 32>}, {pipeline_mode = #tpu.pipeline_mode<synchronous>, transform_indices = @transform_6, window_bounds = array<i64: 32, 32>}, {pipeline_mode = #tpu.pipeline_mode<synchronous>, transform_indices = @transform_7, window_bounds = array<i64: 1, 32>}, {pipeline_mode = #tpu.pipeline_mode<synchronous>, transform_indices = @transform_8, window_bounds = array<i64: 1, 32>}, {pipeline_mode = #tpu.pipeline_mode<synchronous>, transform_indices = @transform_9, window_bounds = array<i64: 1, 32>}, {transform_indices = @transform_10, window_bounds = array<i64: 1, 8, 32>}, {transform_indices = @transform_11, window_bounds = array<i64: 4, 1, 8, 8>}]} {
    %c0 = arith.constant 0 : index
    %c0_0 = arith.constant 0 : index
    %c0_1 = arith.constant 0 : index
    %0 = vector.load %arg2[%c0, %c0_0, %c0_1] : memref<1x8x32xf32, #tpu.memory_space<vmem>>, vector<1x8x32xf32>
    %1 = vector.shape_cast %0 : vector<1x8x32xf32> to vector<8x32xf32>
    %c0_2 = arith.constant 0 : index
    %c0_3 = arith.constant 0 : index
    %c0_4 = arith.constant 0 : index
    %2 = vector.load %arg3[%c0_2, %c0_3, %c0_4] : memref<1x8x32xbf16, #tpu.memory_space<vmem>>, vector<1x8x32xbf16>
    %3 = vector.shape_cast %2 : vector<1x8x32xbf16> to vector<8x32xbf16>
    %c0_5 = arith.constant 0 : index
    %c0_6 = arith.constant 0 : index
    %c0_7 = arith.constant 0 : index
    %4 = vector.load %arg4[%c0_5, %c0_6, %c0_7] : memref<1x8x32xbf16, #tpu.memory_space<vmem>>, vector<1x8x32xbf16>
    %5 = vector.shape_cast %4 : vector<1x8x32xbf16> to vector<8x32xbf16>
    %6 = arith.truncf %1 : vector<8x32xf32> to vector<8x32xbf16>
    %c0_8 = arith.constant 0 : index
    %c0_9 = arith.constant 0 : index
    %7 = vector.load %arg5[%c0_8, %c0_9] : memref<32x32xbf16, #tpu.memory_space<vmem>>, vector<32x32xbf16>
    %cst = arith.constant dense<0.000000e+00> : vector<8x32xf32>
    %8 = tpu.matmul %6, %7, %cst {dimension_numbers = #tpu.dot_dimension_numbers<[1], [0], [0], [1], [0, 0, 1, 1], [], []>} : vector<8x32xbf16>, vector<32x32xbf16>, vector<8x32xf32> -> vector<8x32xf32>
    %c0_10 = arith.constant 0 : index
    %c0_11 = arith.constant 0 : index
    %9 = vector.load %arg6[%c0_10, %c0_11] : memref<32x32xbf16, #tpu.memory_space<vmem>>, vector<32x32xbf16>
    %cst_12 = arith.constant dense<0.000000e+00> : vector<8x32xf32>
    %10 = tpu.matmul %3, %9, %cst_12 {dimension_numbers = #tpu.dot_dimension_numbers<[1], [0], [0], [1], [0, 0, 1, 1], [], []>} : vector<8x32xbf16>, vector<32x32xbf16>, vector<8x32xf32> -> vector<8x32xf32>
    %c0_13 = arith.constant 0 : index
    %c0_14 = arith.constant 0 : index
    %11 = vector.load %arg7[%c0_13, %c0_14] : memref<32x32xbf16, #tpu.memory_space<vmem>>, vector<32x32xbf16>
    %cst_15 = arith.constant dense<0.000000e+00> : vector<8x32xf32>
    %12 = tpu.matmul %5, %11, %cst_15 {dimension_numbers = #tpu.dot_dimension_numbers<[1], [0], [0], [1], [0, 0, 1, 1], [], []>} : vector<8x32xbf16>, vector<32x32xbf16>, vector<8x32xf32> -> vector<8x32xf32>
    %13 = arith.truncf %8 : vector<8x32xf32> to vector<8x32xbf16>
    %14 = arith.truncf %10 : vector<8x32xf32> to vector<8x32xbf16>
    %15 = arith.truncf %12 : vector<8x32xf32> to vector<8x32xbf16>
    %cst_16 = arith.constant 0.000000e+00 : f32
    %16 = vector.broadcast %cst_16 : f32 to vector<8x32xf32>
    %17 = vector.extract_strided_slice %13 {offsets = [0, 0], sizes = [8, 8], strides = [1, 1]} : vector<8x32xbf16> to vector<8x8xbf16>
    %18 = vector.extract_strided_slice %14 {offsets = [0, 0], sizes = [8, 8], strides = [1, 1]} : vector<8x32xbf16> to vector<8x8xbf16>
    %19 = vector.extract_strided_slice %15 {offsets = [0, 0], sizes = [8, 8], strides = [1, 1]} : vector<8x32xbf16> to vector<8x8xbf16>
    %cst_17 = arith.constant dense<0.000000e+00> : vector<8x8xf32>
    %20 = tpu.matmul %17, %18, %cst_17 {dimension_numbers = #tpu.dot_dimension_numbers<[1], [1], [0], [0], [0, 0, 1, 0], [], []>} : vector<8x8xbf16>, vector<8x8xbf16>, vector<8x8xf32> -> vector<8x8xf32>
    %cst_18 = arith.constant dense<0xFF800000> : vector<8xf32>
    %21 = vector.multi_reduction <maximumf>, %20, %cst_18 [1] : vector<8x8xf32> to vector<8xf32>
    %22 = vector.shape_cast %21 : vector<8xf32> to vector<8x1xf32>
    %23 = vector.broadcast %22 : vector<8x1xf32> to vector<8x8xf32>
    %24 = arith.subf %20, %23 : vector<8x8xf32>
    %25 = math.exp %24 : vector<8x8xf32>
    %cst_19 = arith.constant dense<0.000000e+00> : vector<8xf32>
    %26 = vector.multi_reduction <add>, %25, %cst_19 [1] : vector<8x8xf32> to vector<8xf32>
    %27 = vector.shape_cast %26 : vector<8xf32> to vector<8x1xf32>
    %28 = tpu.reciprocal %27 : vector<8x1xf32> -> vector<8x1xf32>
    %29 = vector.broadcast %28 : vector<8x1xf32> to vector<8x8xf32>
    %30 = arith.mulf %25, %29 : vector<8x8xf32>
    %31 = arith.truncf %30 : vector<8x8xf32> to vector<8x8xbf16>
    %c0_20 = arith.constant 0 : index
    %c0_21 = arith.constant 0 : index
    %c0_22 = arith.constant 0 : index
    %c0_23 = arith.constant 0 : index
    %32 = vector.load %arg13[%c0_20, %c0_21, %c0_22, %c0_23] : memref<4x1x8x8xbf16, #tpu.memory_space<vmem>>, vector<1x1x8x8xbf16>
    %33 = vector.shape_cast %32 : vector<1x1x8x8xbf16> to vector<8x8xbf16>
    %34 = vector.shape_cast %31 : vector<8x8xbf16> to vector<1x1x8x8xbf16>
    tpu.vector_store %arg13[%c0_20, %c0_21, %c0_22, %c0_23], %34 {strides = array<i32>} : memref<4x1x8x8xbf16, #tpu.memory_space<vmem>>, vector<1x1x8x8xbf16>,
    %cst_24 = arith.constant dense<0.000000e+00> : vector<8x8xf32>
    %35 = tpu.matmul %31, %19, %cst_24 {dimension_numbers = #tpu.dot_dimension_numbers<[1], [0], [0], [1], [0, 0, 1, 1], [], []>} : vector<8x8xbf16>, vector<8x8xbf16>, vector<8x8xf32> -> vector<8x8xf32>
    %36 = arith.truncf %35 : vector<8x8xf32> to vector<8x8xbf16>
    %c0_25 = arith.constant 0 : index
    %c0_26 = arith.constant 0 : index
    %37 = vector.load %arg8[%c0_25, %c0_26] : memref<32x32xbf16, #tpu.memory_space<vmem>>, vector<8x32xbf16>
    %cst_27 = arith.constant dense<0.000000e+00> : vector<8x32xf32>
    %38 = tpu.matmul %36, %37, %cst_27 {dimension_numbers = #tpu.dot_dimension_numbers<[1], [0], [0], [1], [0, 0, 1, 1], [], []>} : vector<8x8xbf16>, vector<8x32xbf16>, vector<8x32xf32> -> vector<8x32xf32>
    %39 = arith.addf %16, %38 : vector<8x32xf32>
    %40 = vector.extract_strided_slice %13 {offsets = [0, 8], sizes = [8, 8], strides = [1, 1]} : vector<8x32xbf16> to vector<8x8xbf16>
    %41 = vector.extract_strided_slice %14 {offsets = [0, 8], sizes = [8, 8], strides = [1, 1]} : vector<8x32xbf16> to vector<8x8xbf16>
    %42 = vector.extract_strided_slice %15 {offsets = [0, 8], sizes = [8, 8], strides = [1, 1]} : vector<8x32xbf16> to vector<8x8xbf16>
    %cst_28 = arith.constant dense<0.000000e+00> : vector<8x8xf32>
    %43 = tpu.matmul %40, %41, %cst_28 {dimension_numbers = #tpu.dot_dimension_numbers<[1], [1], [0], [0], [0, 0, 1, 0], [], []>} : vector<8x8xbf16>, vector<8x8xbf16>, vector<8x8xf32> -> vector<8x8xf32>
    %cst_29 = arith.constant dense<0xFF800000> : vector<8xf32>
    %44 = vector.multi_reduction <maximumf>, %43, %cst_29 [1] : vector<8x8xf32> to vector<8xf32>
    %45 = vector.shape_cast %44 : vector<8xf32> to vector<8x1xf32>
    %46 = vector.broadcast %45 : vector<8x1xf32> to vector<8x8xf32>
    %47 = arith.subf %43, %46 : vector<8x8xf32>
    %48 = math.exp %47 : vector<8x8xf32>
    %cst_30 = arith.constant dense<0.000000e+00> : vector<8xf32>
    %49 = vector.multi_reduction <add>, %48, %cst_30 [1] : vector<8x8xf32> to vector<8xf32>
    %50 = vector.shape_cast %49 : vector<8xf32> to vector<8x1xf32>
    %51 = tpu.reciprocal %50 : vector<8x1xf32> -> vector<8x1xf32>
    %52 = vector.broadcast %51 : vector<8x1xf32> to vector<8x8xf32>
    %53 = arith.mulf %48, %52 : vector<8x8xf32>
    %54 = arith.truncf %53 : vector<8x8xf32> to vector<8x8xbf16>
    %c1 = arith.constant 1 : index
    %c0_31 = arith.constant 0 : index
    %c0_32 = arith.constant 0 : index
    %c0_33 = arith.constant 0 : index
    %55 = vector.load %arg13[%c1, %c0_31, %c0_32, %c0_33] : memref<4x1x8x8xbf16, #tpu.memory_space<vmem>>, vector<1x1x8x8xbf16>
    %56 = vector.shape_cast %55 : vector<1x1x8x8xbf16> to vector<8x8xbf16>
    %57 = vector.shape_cast %54 : vector<8x8xbf16> to vector<1x1x8x8xbf16>
    tpu.vector_store %arg13[%c1, %c0_31, %c0_32, %c0_33], %57 {strides = array<i32>} : memref<4x1x8x8xbf16, #tpu.memory_space<vmem>>, vector<1x1x8x8xbf16>,
    %cst_34 = arith.constant dense<0.000000e+00> : vector<8x8xf32>
    %58 = tpu.matmul %54, %42, %cst_34 {dimension_numbers = #tpu.dot_dimension_numbers<[1], [0], [0], [1], [0, 0, 1, 1], [], []>} : vector<8x8xbf16>, vector<8x8xbf16>, vector<8x8xf32> -> vector<8x8xf32>
    %59 = arith.truncf %58 : vector<8x8xf32> to vector<8x8xbf16>
    %c8 = arith.constant 8 : index
    %c0_35 = arith.constant 0 : index
    %60 = vector.load %arg8[%c8, %c0_35] : memref<32x32xbf16, #tpu.memory_space<vmem>>, vector<8x32xbf16>
    %cst_36 = arith.constant dense<0.000000e+00> : vector<8x32xf32>
    %61 = tpu.matmul %59, %60, %cst_36 {dimension_numbers = #tpu.dot_dimension_numbers<[1], [0], [0], [1], [0, 0, 1, 1], [], []>} : vector<8x8xbf16>, vector<8x32xbf16>, vector<8x32xf32> -> vector<8x32xf32>
    %62 = arith.addf %39, %61 : vector<8x32xf32>
    %63 = vector.extract_strided_slice %13 {offsets = [0, 16], sizes = [8, 8], strides = [1, 1]} : vector<8x32xbf16> to vector<8x8xbf16>
    %64 = vector.extract_strided_slice %14 {offsets = [0, 16], sizes = [8, 8], strides = [1, 1]} : vector<8x32xbf16> to vector<8x8xbf16>
    %65 = vector.extract_strided_slice %15 {offsets = [0, 16], sizes = [8, 8], strides = [1, 1]} : vector<8x32xbf16> to vector<8x8xbf16>
    %cst_37 = arith.constant dense<0.000000e+00> : vector<8x8xf32>
    %66 = tpu.matmul %63, %64, %cst_37 {dimension_numbers = #tpu.dot_dimension_numbers<[1], [1], [0], [0], [0, 0, 1, 0], [], []>} : vector<8x8xbf16>, vector<8x8xbf16>, vector<8x8xf32> -> vector<8x8xf32>
    %cst_38 = arith.constant dense<0xFF800000> : vector<8xf32>
    %67 = vector.multi_reduction <maximumf>, %66, %cst_38 [1] : vector<8x8xf32> to vector<8xf32>
    %68 = vector.shape_cast %67 : vector<8xf32> to vector<8x1xf32>
    %69 = vector.broadcast %68 : vector<8x1xf32> to vector<8x8xf32>
    %70 = arith.subf %66, %69 : vector<8x8xf32>
    %71 = math.exp %70 : vector<8x8xf32>
    %cst_39 = arith.constant dense<0.000000e+00> : vector<8xf32>
    %72 = vector.multi_reduction <add>, %71, %cst_39 [1] : vector<8x8xf32> to vector<8xf32>
    %73 = vector.shape_cast %72 : vector<8xf32> to vector<8x1xf32>
    %74 = tpu.reciprocal %73 : vector<8x1xf32> -> vector<8x1xf32>
    %75 = vector.broadcast %74 : vector<8x1xf32> to vector<8x8xf32>
    %76 = arith.mulf %71, %75 : vector<8x8xf32>
    %77 = arith.truncf %76 : vector<8x8xf32> to vector<8x8xbf16>
    %c2 = arith.constant 2 : index
    %c0_40 = arith.constant 0 : index
    %c0_41 = arith.constant 0 : index
    %c0_42 = arith.constant 0 : index
    %78 = vector.load %arg13[%c2, %c0_40, %c0_41, %c0_42] : memref<4x1x8x8xbf16, #tpu.memory_space<vmem>>, vector<1x1x8x8xbf16>
    %79 = vector.shape_cast %78 : vector<1x1x8x8xbf16> to vector<8x8xbf16>
    %80 = vector.shape_cast %77 : vector<8x8xbf16> to vector<1x1x8x8xbf16>
    tpu.vector_store %arg13[%c2, %c0_40, %c0_41, %c0_42], %80 {strides = array<i32>} : memref<4x1x8x8xbf16, #tpu.memory_space<vmem>>, vector<1x1x8x8xbf16>,
    %cst_43 = arith.constant dense<0.000000e+00> : vector<8x8xf32>
    %81 = tpu.matmul %77, %65, %cst_43 {dimension_numbers = #tpu.dot_dimension_numbers<[1], [0], [0], [1], [0, 0, 1, 1], [], []>} : vector<8x8xbf16>, vector<8x8xbf16>, vector<8x8xf32> -> vector<8x8xf32>
    %82 = arith.truncf %81 : vector<8x8xf32> to vector<8x8xbf16>
    %c16 = arith.constant 16 : index
    %c0_44 = arith.constant 0 : index
    %83 = vector.load %arg8[%c16, %c0_44] : memref<32x32xbf16, #tpu.memory_space<vmem>>, vector<8x32xbf16>
    %cst_45 = arith.constant dense<0.000000e+00> : vector<8x32xf32>
    %84 = tpu.matmul %82, %83, %cst_45 {dimension_numbers = #tpu.dot_dimension_numbers<[1], [0], [0], [1], [0, 0, 1, 1], [], []>} : vector<8x8xbf16>, vector<8x32xbf16>, vector<8x32xf32> -> vector<8x32xf32>
    %85 = arith.addf %62, %84 : vector<8x32xf32>
    %86 = vector.extract_strided_slice %13 {offsets = [0, 24], sizes = [8, 8], strides = [1, 1]} : vector<8x32xbf16> to vector<8x8xbf16>
    %87 = vector.extract_strided_slice %14 {offsets = [0, 24], sizes = [8, 8], strides = [1, 1]} : vector<8x32xbf16> to vector<8x8xbf16>
    %88 = vector.extract_strided_slice %15 {offsets = [0, 24], sizes = [8, 8], strides = [1, 1]} : vector<8x32xbf16> to vector<8x8xbf16>
    %cst_46 = arith.constant dense<0.000000e+00> : vector<8x8xf32>
    %89 = tpu.matmul %86, %87, %cst_46 {dimension_numbers = #tpu.dot_dimension_numbers<[1], [1], [0], [0], [0, 0, 1, 0], [], []>} : vector<8x8xbf16>, vector<8x8xbf16>, vector<8x8xf32> -> vector<8x8xf32>
    %cst_47 = arith.constant dense<0xFF800000> : vector<8xf32>
    %90 = vector.multi_reduction <maximumf>, %89, %cst_47 [1] : vector<8x8xf32> to vector<8xf32>
    %91 = vector.shape_cast %90 : vector<8xf32> to vector<8x1xf32>
    %92 = vector.broadcast %91 : vector<8x1xf32> to vector<8x8xf32>
    %93 = arith.subf %89, %92 : vector<8x8xf32>
    %94 = math.exp %93 : vector<8x8xf32>
    %cst_48 = arith.constant dense<0.000000e+00> : vector<8xf32>
    %95 = vector.multi_reduction <add>, %94, %cst_48 [1] : vector<8x8xf32> to vector<8xf32>
    %96 = vector.shape_cast %95 : vector<8xf32> to vector<8x1xf32>
    %97 = tpu.reciprocal %96 : vector<8x1xf32> -> vector<8x1xf32>
    %98 = vector.broadcast %97 : vector<8x1xf32> to vector<8x8xf32>
    %99 = arith.mulf %94, %98 : vector<8x8xf32>
    %100 = arith.truncf %99 : vector<8x8xf32> to vector<8x8xbf16>
    %c3 = arith.constant 3 : index
    %c0_49 = arith.constant 0 : index
    %c0_50 = arith.constant 0 : index
    %c0_51 = arith.constant 0 : index
    %101 = vector.load %arg13[%c3, %c0_49, %c0_50, %c0_51] : memref<4x1x8x8xbf16, #tpu.memory_space<vmem>>, vector<1x1x8x8xbf16>
    %102 = vector.shape_cast %101 : vector<1x1x8x8xbf16> to vector<8x8xbf16>
    %103 = vector.shape_cast %100 : vector<8x8xbf16> to vector<1x1x8x8xbf16>
    tpu.vector_store %arg13[%c3, %c0_49, %c0_50, %c0_51], %103 {strides = array<i32>} : memref<4x1x8x8xbf16, #tpu.memory_space<vmem>>, vector<1x1x8x8xbf16>,
    %cst_52 = arith.constant dense<0.000000e+00> : vector<8x8xf32>
    %104 = tpu.matmul %100, %88, %cst_52 {dimension_numbers = #tpu.dot_dimension_numbers<[1], [0], [0], [1], [0, 0, 1, 1], [], []>} : vector<8x8xbf16>, vector<8x8xbf16>, vector<8x8xf32> -> vector<8x8xf32>
    %105 = arith.truncf %104 : vector<8x8xf32> to vector<8x8xbf16>
    %c24 = arith.constant 24 : index
    %c0_53 = arith.constant 0 : index
    %106 = vector.load %arg8[%c24, %c0_53] : memref<32x32xbf16, #tpu.memory_space<vmem>>, vector<8x32xbf16>
    %cst_54 = arith.constant dense<0.000000e+00> : vector<8x32xf32>
    %107 = tpu.matmul %105, %106, %cst_54 {dimension_numbers = #tpu.dot_dimension_numbers<[1], [0], [0], [1], [0, 0, 1, 1], [], []>} : vector<8x8xbf16>, vector<8x32xbf16>, vector<8x32xf32> -> vector<8x32xf32>
    %108 = arith.addf %85, %107 : vector<8x32xf32>
    %109 = arith.addf %1, %108 : vector<8x32xf32>
    %c0_55 = arith.constant 0 : index
    %c0_56 = arith.constant 0 : index
    %110 = vector.load %arg9[%c0_55, %c0_56] : memref<1x32xf32, #tpu.memory_space<vmem>>, vector<1x32xf32>
    %111 = vector.broadcast %110 : vector<1x32xf32> to vector<8x32xf32>
    %112 = arith.addf %109, %111 : vector<8x32xf32>
    %cst_57 = arith.constant dense<0.000000e+00> : vector<8xf32>
    %113 = vector.multi_reduction <add>, %112, %cst_57 [1] : vector<8x32xf32> to vector<8xf32>
    %114 = vector.shape_cast %113 : vector<8xf32> to vector<8x1xf32>
    %cst_58 = arith.constant 3.200000e+01 : f32
    %115 = vector.broadcast %cst_58 : f32 to vector<8x1xf32>
    %116 = arith.divf %114, %115 : vector<8x1xf32>
    %117 = vector.broadcast %116 : vector<8x1xf32> to vector<8x32xf32>
    %118 = arith.subf %112, %117 : vector<8x32xf32>
    %119 = arith.mulf %118, %118 : vector<8x32xf32>
    %cst_59 = arith.constant dense<0.000000e+00> : vector<8xf32>
    %120 = vector.multi_reduction <add>, %119, %cst_59 [1] : vector<8x32xf32> to vector<8xf32>
    %121 = vector.shape_cast %120 : vector<8xf32> to vector<8x1xf32>
    %cst_60 = arith.constant 3.100000e+01 : f32
    %122 = vector.broadcast %cst_60 : f32 to vector<8x1xf32>
    %123 = arith.divf %121, %122 : vector<8x1xf32>
    %124 = math.sqrt %123 : vector<8x1xf32>
    %cst_61 = arith.constant 1.000000e-03 : f32
    %125 = vector.broadcast %cst_61 : f32 to vector<8x1xf32>
    %126 = arith.addf %124, %125 : vector<8x1xf32>
    %127 = tpu.reciprocal %126 : vector<8x1xf32> -> vector<8x1xf32>
    %c0_62 = arith.constant 0 : index
    %c0_63 = arith.constant 0 : index
    %128 = vector.load %arg10[%c0_62, %c0_63] : memref<1x32xf32, #tpu.memory_space<vmem>>, vector<1x32xf32>
    %129 = vector.broadcast %127 : vector<8x1xf32> to vector<8x32xf32>
    %130 = arith.mulf %118, %129 : vector<8x32xf32>
    %131 = vector.broadcast %128 : vector<1x32xf32> to vector<8x32xf32>
    %132 = arith.mulf %131, %130 : vector<8x32xf32>
    %c0_64 = arith.constant 0 : index
    %c0_65 = arith.constant 0 : index
    %133 = vector.load %arg11[%c0_64, %c0_65] : memref<1x32xf32, #tpu.memory_space<vmem>>, vector<1x32xf32>
    %134 = vector.broadcast %133 : vector<1x32xf32> to vector<8x32xf32>
    %135 = arith.addf %132, %134 : vector<8x32xf32>
    %136 = vector.shape_cast %135 : vector<8x32xf32> to vector<1x8x32xf32>
    %c0_66 = arith.constant 0 : index
    %c0_67 = arith.constant 0 : index
    %c0_68 = arith.constant 0 : index
    %137 = vector.load %arg12[%c0_66, %c0_67, %c0_68] : memref<1x8x32xf32, #tpu.memory_space<vmem>>, vector<1x8x32xf32>
    tpu.vector_store %arg12[%c0_66, %c0_67, %c0_68], %136 {strides = array<i32>} : memref<1x8x32xf32, #tpu.memory_space<vmem>>, vector<1x8x32xf32>,
    return
  }
  func.func @transform_0(%arg0: i32, %arg1: i32) -> (i32, i32, i32) {
    %c0_i32 = arith.constant 0 : i32
    %c0_i32_0 = arith.constant 0 : i32
    return %arg0, %arg1, %c0_i32 : i32, i32, i32
  }
  func.func @transform_1(%arg0: i32, %arg1: i32) -> (i32, i32, i32) {
    %c0_i32 = arith.constant 0 : i32
    %c0_i32_0 = arith.constant 0 : i32
    %c0_i32_1 = arith.constant 0 : i32
    return %arg0, %c0_i32, %c0_i32_0 : i32, i32, i32
  }
  func.func @transform_2(%arg0: i32, %arg1: i32) -> (i32, i32, i32) {
    %c0_i32 = arith.constant 0 : i32
    %c0_i32_0 = arith.constant 0 : i32
    %c0_i32_1 = arith.constant 0 : i32
    return %arg0, %c0_i32, %c0_i32_0 : i32, i32, i32
  }
  func.func @transform_3(%arg0: i32, %arg1: i32) -> (i32, i32) {
    %c0_i32 = arith.constant 0 : i32
    %c0_i32_0 = arith.constant 0 : i32
    %c0_i32_1 = arith.constant 0 : i32
    return %c0_i32, %c0_i32_0 : i32, i32
  }
  func.func @transform_4(%arg0: i32, %arg1: i32) -> (i32, i32) {
    %c0_i32 = arith.constant 0 : i32
    %c0_i32_0 = arith.constant 0 : i32
    %c0_i32_1 = arith.constant 0 : i32
    return %c0_i32, %c0_i32_0 : i32, i32
  }
  func.func @transform_5(%arg0: i32, %arg1: i32) -> (i32, i32) {
    %c0_i32 = arith.constant 0 : i32
    %c0_i32_0 = arith.constant 0 : i32
    %c0_i32_1 = arith.constant 0 : i32
    return %c0_i32, %c0_i32_0 : i32, i32
  }
  func.func @transform_6(%arg0: i32, %arg1: i32) -> (i32, i32) {
    %c0_i32 = arith.constant 0 : i32
    %c0_i32_0 = arith.constant 0 : i32
    %c0_i32_1 = arith.constant 0 : i32
    return %c0_i32, %c0_i32_0 : i32, i32
  }
  func.func @transform_7(%arg0: i32, %arg1: i32) -> (i32, i32) {
    %c0_i32 = arith.constant 0 : i32
    %c0_i32_0 = arith.constant 0 : i32
    %c0_i32_1 = arith.constant 0 : i32
    return %c0_i32, %c0_i32_0 : i32, i32
  }
  func.func @transform_8(%arg0: i32, %arg1: i32) -> (i32, i32) {
    %c0_i32 = arith.constant 0 : i32
    %c0_i32_0 = arith.constant 0 : i32
    %c0_i32_1 = arith.constant 0 : i32
    return %c0_i32, %c0_i32_0 : i32, i32
  }
  func.func @transform_9(%arg0: i32, %arg1: i32) -> (i32, i32) {
    %c0_i32 = arith.constant 0 : i32
    %c0_i32_0 = arith.constant 0 : i32
    %c0_i32_1 = arith.constant 0 : i32
    return %c0_i32, %c0_i32_0 : i32, i32
  }
  func.func @transform_10(%arg0: i32, %arg1: i32) -> (i32, i32, i32) {
    %c0_i32 = arith.constant 0 : i32
    %c0_i32_0 = arith.constant 0 : i32
    return %arg0, %arg1, %c0_i32 : i32, i32, i32
  }
  func.func @transform_11(%arg0: i32, %arg1: i32) -> (i32, i32, i32, i32) {
    %c0_i32 = arith.constant 0 : i32
    %c0_i32_0 = arith.constant 0 : i32
    %c0_i32_1 = arith.constant 0 : i32
    return %c0_i32, %arg0, %arg1, %c0_i32_0 : i32, i32, i32, i32
  }
}

</mosaic_0001>

<llo_original>
// kernel: tpu_custom_call.1
$region0: #{tpu_custom_call.1}
  #allocation0 [shape = 'u32[]', space=smem, size = 0x4, offset = 0x4, fixed_abs, tag = 'smem constant byte address 0x4 - core index']
  #allocation1 [shape = 'u32[144,128]{1,0:T(1,128)}', space=vmem, size = 0x12000, scoped, tag = 'internal scratch']
  %s0 = inlined_call_operand.hbm [shape: f32[2,8,32], index: 0, kind: input, shape index: {}]
  %s1 = inlined_call_operand.hbm [shape: bf16[2,8,32], index: 1, kind: input, shape index: {}]
  %s2 = inlined_call_operand.hbm [shape: bf16[2,8,32], index: 2, kind: input, shape index: {}]
  %s3 = inlined_call_operand.hbm [shape: bf16[32,32], index: 3, kind: input, shape index: {}]
  %s4 = inlined_call_operand.hbm [shape: bf16[32,32], index: 4, kind: input, shape index: {}]
  %s5 = inlined_call_operand.hbm [shape: bf16[32,32], index: 5, kind: input, shape index: {}]
  %s6 = inlined_call_operand.hbm [shape: bf16[32,32], index: 6, kind: input, shape index: {}]
  %s7 = inlined_call_operand.vmem [shape: f32[1,32], index: 7, kind: input, shape index: {}]
  %s8 = inlined_call_operand.vmem [shape: f32[1,32], index: 8, kind: input, shape index: {}]
  %s9 = inlined_call_operand.vmem [shape: f32[1,32], index: 9, kind: input, shape index: {}]
  %s10 = inlined_call_operand.hbm [shape: f32[2,8,32], index: 10, kind: output, shape index: {0}]
  %s11 = inlined_call_operand.hbm [shape: bf16[4,2,8,8], index: 11, kind: output, shape index: {1}]
  %12 = xla_tuple %s10, %s11
  %s13 = sld [smem:[#allocation0]]
  $region109: #{tpu_custom_call.1} parent=0
    _
  %s15 = ssub.s32 1, %s13
  %s16 = scalar_select 0, %s15, %s13
  $region1: #{tpu_custom_call.1} parent=0
    #allocation2 [shape = 'u8[8192]{0}', space=vmem, size = 0x2000, scoped, tag = 'input window, operand 0']
    #allocation3 [shape = 's32[2]{0}', space=sflag, size = 0x8, scoped, tag = 'scoped memory for tpu_custom_call.1']
    #allocation4 [shape = 's32[2]{0}', space=sflag, size = 0x8, scoped, tag = 'scoped memory for tpu_custom_call.1']
    #allocation5 [shape = 'u8[4096]{0}', space=vmem, size = 0x1000, scoped, tag = 'input window, operand 1']
    #allocation6 [shape = 's32[2]{0}', space=sflag, size = 0x8, scoped, tag = 'scoped memory for tpu_custom_call.1']
    #allocation7 [shape = 'u8[4096]{0}', space=vmem, size = 0x1000, scoped, tag = 'input window, operand 2']
    #allocation8 [shape = 'u8[8192]{0}', space=vmem, size = 0x2000, scoped, tag = 'input window, operand 3, single buffered']
    #allocation9 [shape = 's32[1]{0}', space=sflag, size = 0x4, scoped, tag = 'scoped memory for tpu_custom_call.1']
    #allocation10 [shape = 'u8[8192]{0}', space=vmem, size = 0x2000, scoped, tag = 'input window, operand 4, single buffered']
    #allocation11 [shape = 'u8[8192]{0}', space=vmem, size = 0x2000, scoped, tag = 'input window, operand 5, single buffered']
    #allocation12 [shape = 's32[1]{0}', space=sflag, size = 0x4, scoped, tag = 'scoped memory for tpu_custom_call.1']
    #allocation13 [shape = 'u8[8192]{0}', space=vmem, size = 0x2000, scoped, tag = 'input window, operand 6, single buffered']
    #allocation14 [shape = 'u8[8192]{0}', space=vmem, size = 0x2000, scoped, tag = 'output window, operand 0']
    #allocation15 [shape = 'u8[16384]{0}', space=vmem, size = 0x4000, scoped, tag = 'output window, operand 1']
    #allocation16 [shape = 's32[2]{0}', space=sflag, size = 0x8, scoped, tag = 'scoped memory for tpu_custom_call.1']
    %17 = vsyncpa [#allocation3], 0
    %s18 = scalar_lea.sflag [#allocation3], 1
    %19 = vsyncpa %s18, 0
    %20 = vsyncpa [#allocation6], 0
    %s21 = scalar_lea.sflag [#allocation6], 1
    %22 = vsyncpa %s21, 0
    %23 = vsyncpa [#allocation9], 0
    %24 = vsyncpa [#allocation12], 0
    %25 = vsyncpa [#allocation4], 0
    %s26 = scalar_lea.sflag [#allocation4], 1
    %27 = vsyncpa %s26, 0
    %28 = vsyncpa [#allocation16], 0
    %s29 = scalar_lea.sflag [#allocation16], 1
    %30 = vsyncpa %s29, 0
    loop: start=0, step=1, limit=4
    $region2: #{tpu_custom_call.1} parent=1 // loop_pre_header
      _
    $region3: #{tpu_custom_call.1} parent=1 // loop_header
      %s32 = sphi 0, %s36
      %p33 = scmp.ge.s32.totalorder %s32, 4
      %s39 = sphi 0, %s51
      %s40 = sphi 0, %s47
      %s41 = sphi 0, %s39
      %s42 = sphi 0, %s40
      %s43 = sphi 0, %s41
      %s44 = sphi 0, %s42
      %s56 = sphi 0, %s58
      %s59 = sphi 0, %s56
      %s60 = sphi 0, %s59
      %s76 = sphi 0, %s60
      %s82 = sphi 0, %s84
      %s85 = sphi 0, %s82
      %s86 = sphi 0, %s85
      %s102 = sphi 0, %s86
      %s108 = sphi 0, %s110
      %s111 = sphi 0, %s108
      %s112 = sphi 0, %s111
      %s128 = sphi 0, %s112
      %s132 = sphi 0, %s132
      %s134 = sphi 0, %s132
      %s135 = sphi 0, %s134
      %s149 = sphi 0, %s135
      %s153 = sphi 0, %s153
      %s155 = sphi 0, %s153
      %s156 = sphi 0, %s155
      %s170 = sphi 0, %s156
      %s174 = sphi 0, %s174
      %s176 = sphi 0, %s174
      %s177 = sphi 0, %s176
      %s191 = sphi 0, %s177
      %s195 = sphi 0, %s195
      %s197 = sphi 0, %s195
      %s198 = sphi 0, %s197
      %s212 = sphi 0, %s198
      %s216 = sphi 0, %s216
      %s218 = sphi 0, %s216
      %s219 = sphi 0, %s218
      %s233 = sphi 0, %s219
      %s237 = sphi 0, %s237
      %s239 = sphi 0, %s237
      %s240 = sphi 0, %s239
      %s254 = sphi 0, %s240
      %s258 = sphi 0, %s258
      %s260 = sphi 0, %s258
      %s261 = sphi 0, %s260
      %s275 = sphi 0, %s261
      %s283 = sphi 0, %s285
      %s286 = sphi 0, %s283
      %s287 = sphi 0, %s286
      %s303 = sphi 0, %s287
      %s311 = sphi 0, %s313
      %s314 = sphi 0, %s311
      %s315 = sphi 0, %s314
      %s331 = sphi 0, %s315
    $region4: #{tpu_custom_call.1} parent=1 // loop_header_branch
      %35 = sbr.rel (%p33) target = $region8
    $region5: #{tpu_custom_call.1} parent=1 // loop_body
      %s37 = ssub.s32 %s32, 1
      %s38 = ssub.s32 %s32, 2
      %s45 = sadd.s32 1, %s40
      %p46 = scmp.ge.s32.totalorder %s45, 1
      %s47 = scalar_select %p46, 0, %s45
      %s48 = sadd.s32 1, %s39
      %s49 = scalar_select %p46, %s48, %s39
      %p50 = scmp.ge.s32.totalorder %s49, 2
      %s51 = scalar_select %p50, 0, %s49
      %s52 = ssub.s32 %s39, %s51
      %s53 = ssub.s32 %s40, %s47
      %s54 = sor.u32 %s52, %s53
      %p55 = scmp.eq.s32.totalorder %s54, 0
      %s57 = sadd.s32 %s56, 1
      %s58 = scalar_select %p55, %s56, %s57
      %p61 = pneg %p55
      %p62 = scmp.eq.s32.totalorder %s32, 1
      %p63 = por %p61, %p62
      %p64 = scmp.ne.s32.totalorder %s56, %s59
      %p65 = scmp.eq.s32.totalorder %s32, 0
      %p66 = por %p64, %p65
      %p67 = scmp.ne.s32.totalorder %s56, %s59
      %p68 = scmp.eq.s32.totalorder %s37, 1
      %p69 = por %p67, %p68
      %p70 = scmp.ne.s32.totalorder %s59, %s60
      %p71 = scmp.eq.s32.totalorder %s37, 0
      %p72 = por %p70, %p71
      %p73 = scmp.ne.s32.totalorder %s59, %s60
      %p74 = scmp.eq.s32.totalorder %s38, 1
      %p75 = por %p73, %p74
      %p77 = scmp.ne.s32.totalorder %s60, %s76
      %p78 = scmp.eq.s32.totalorder %s38, 0
      %p79 = por %p77, %p78
      %s80 = ssub.s32 %s39, %s51
      %p81 = scmp.eq.s32.totalorder %s80, 0
      %s83 = sadd.s32 %s82, 1
      %s84 = scalar_select %p81, %s82, %s83
      %p87 = pneg %p81
      %p88 = scmp.eq.s32.totalorder %s32, 1
      %p89 = por %p87, %p88
      %p90 = scmp.ne.s32.totalorder %s82, %s85
      %p91 = scmp.eq.s32.totalorder %s32, 0
      %p92 = por %p90, %p91
      %p93 = scmp.ne.s32.totalorder %s82, %s85
      %p94 = scmp.eq.s32.totalorder %s37, 1
      %p95 = por %p93, %p94
      %p96 = scmp.ne.s32.totalorder %s85, %s86
      %p97 = scmp.eq.s32.totalorder %s37, 0
      %p98 = por %p96, %p97
      %p99 = scmp.ne.s32.totalorder %s85, %s86
      %p100 = scmp.eq.s32.totalorder %s38, 1
      %p101 = por %p99, %p100
      %p103 = scmp.ne.s32.totalorder %s86, %s102
      %p104 = scmp.eq.s32.totalorder %s38, 0
      %p105 = por %p103, %p104
      %s106 = ssub.s32 %s39, %s51
      %p107 = scmp.eq.s32.totalorder %s106, 0
      %s109 = sadd.s32 %s108, 1
      %s110 = scalar_select %p107, %s108, %s109
      %p113 = pneg %p107
      %p114 = scmp.eq.s32.totalorder %s32, 1
      %p115 = por %p113, %p114
      %p116 = scmp.ne.s32.totalorder %s108, %s111
      %p117 = scmp.eq.s32.totalorder %s32, 0
      %p118 = por %p116, %p117
      %p119 = scmp.ne.s32.totalorder %s108, %s111
      %p120 = scmp.eq.s32.totalorder %s37, 1
      %p121 = por %p119, %p120
      %p122 = scmp.ne.s32.totalorder %s111, %s112
      %p123 = scmp.eq.s32.totalorder %s37, 0
      %p124 = por %p122, %p123
      %p125 = scmp.ne.s32.totalorder %s111, %s112
      %p126 = scmp.eq.s32.totalorder %s38, 1
      %p127 = por %p125, %p126
      %p129 = scmp.ne.s32.totalorder %s112, %s128
      %p130 = scmp.eq.s32.totalorder %s38, 0
      %p131 = por %p129, %p130
      %s133 = sadd.s32 %s132, 1
      %p136 = scmp.eq.s32.totalorder %s32, 1
      %p137 = scmp.ne.s32.totalorder %s132, %s134
      %p138 = scmp.eq.s32.totalorder %s32, 0
      %p139 = por %p137, %p138
      %p140 = scmp.ne.s32.totalorder %s132, %s134
      %p141 = scmp.eq.s32.totalorder %s37, 1
      %p142 = por %p140, %p141
      %p143 = scmp.ne.s32.totalorder %s134, %s135
      %p144 = scmp.eq.s32.totalorder %s37, 0
      %p145 = por %p143, %p144
      %p146 = scmp.ne.s32.totalorder %s134, %s135
      %p147 = scmp.eq.s32.totalorder %s38, 1
      %p148 = por %p146, %p147
      %p150 = scmp.ne.s32.totalorder %s135, %s149
      %p151 = scmp.eq.s32.totalorder %s38, 0
      %p152 = por %p150, %p151
      %s154 = sadd.s32 %s153, 1
      %p157 = scmp.eq.s32.totalorder %s32, 1
      %p158 = scmp.ne.s32.totalorder %s153, %s155
      %p159 = scmp.eq.s32.totalorder %s32, 0
      %p160 = por %p158, %p159
      %p161 = scmp.ne.s32.totalorder %s153, %s155
      %p162 = scmp.eq.s32.totalorder %s37, 1
      %p163 = por %p161, %p162
      %p164 = scmp.ne.s32.totalorder %s155, %s156
      %p165 = scmp.eq.s32.totalorder %s37, 0
      %p166 = por %p164, %p165
      %p167 = scmp.ne.s32.totalorder %s155, %s156
      %p168 = scmp.eq.s32.totalorder %s38, 1
      %p169 = por %p167, %p168
      %p171 = scmp.ne.s32.totalorder %s156, %s170
      %p172 = scmp.eq.s32.totalorder %s38, 0
      %p173 = por %p171, %p172
      %s175 = sadd.s32 %s174, 1
      %p178 = scmp.eq.s32.totalorder %s32, 1
      %p179 = scmp.ne.s32.totalorder %s174, %s176
      %p180 = scmp.eq.s32.totalorder %s32, 0
      %p181 = por %p179, %p180
      %p182 = scmp.ne.s32.totalorder %s174, %s176
      %p183 = scmp.eq.s32.totalorder %s37, 1
      %p184 = por %p182, %p183
      %p185 = scmp.ne.s32.totalorder %s176, %s177
      %p186 = scmp.eq.s32.totalorder %s37, 0
      %p187 = por %p185, %p186
      %p188 = scmp.ne.s32.totalorder %s176, %s177
      %p189 = scmp.eq.s32.totalorder %s38, 1
      %p190 = por %p188, %p189
      %p192 = scmp.ne.s32.totalorder %s177, %s191
      %p193 = scmp.eq.s32.totalorder %s38, 0
      %p194 = por %p192, %p193
      %s196 = sadd.s32 %s195, 1
      %p199 = scmp.eq.s32.totalorder %s32, 1
      %p200 = scmp.ne.s32.totalorder %s195, %s197
      %p201 = scmp.eq.s32.totalorder %s32, 0
      %p202 = por %p200, %p201
      %p203 = scmp.ne.s32.totalorder %s195, %s197
      %p204 = scmp.eq.s32.totalorder %s37, 1
      %p205 = por %p203, %p204
      %p206 = scmp.ne.s32.totalorder %s197, %s198
      %p207 = scmp.eq.s32.totalorder %s37, 0
      %p208 = por %p206, %p207
      %p209 = scmp.ne.s32.totalorder %s197, %s198
      %p210 = scmp.eq.s32.totalorder %s38, 1
      %p211 = por %p209, %p210
      %p213 = scmp.ne.s32.totalorder %s198, %s212
      %p214 = scmp.eq.s32.totalorder %s38, 0
      %p215 = por %p213, %p214
      %s217 = sadd.s32 %s216, 1
      %p220 = scmp.eq.s32.totalorder %s32, 1
      %p221 = scmp.ne.s32.totalorder %s216, %s218
      %p222 = scmp.eq.s32.totalorder %s32, 0
      %p223 = por %p221, %p222
      %p224 = scmp.ne.s32.totalorder %s216, %s218
      %p225 = scmp.eq.s32.totalorder %s37, 1
      %p226 = por %p224, %p225
      %p227 = scmp.ne.s32.totalorder %s218, %s219
      %p228 = scmp.eq.s32.totalorder %s37, 0
      %p229 = por %p227, %p228
      %p230 = scmp.ne.s32.totalorder %s218, %s219
      %p231 = scmp.eq.s32.totalorder %s38, 1
      %p232 = por %p230, %p231
      %p234 = scmp.ne.s32.totalorder %s219, %s233
      %p235 = scmp.eq.s32.totalorder %s38, 0
      %p236 = por %p234, %p235
      %s238 = sadd.s32 %s237, 1
      %p241 = scmp.eq.s32.totalorder %s32, 1
      %p242 = scmp.ne.s32.totalorder %s237, %s239
      %p243 = scmp.eq.s32.totalorder %s32, 0
      %p244 = por %p242, %p243
      %p245 = scmp.ne.s32.totalorder %s237, %s239
      %p246 = scmp.eq.s32.totalorder %s37, 1
      %p247 = por %p245, %p246
      %p248 = scmp.ne.s32.totalorder %s239, %s240
      %p249 = scmp.eq.s32.totalorder %s37, 0
      %p250 = por %p248, %p249
      %p251 = scmp.ne.s32.totalorder %s239, %s240
      %p252 = scmp.eq.s32.totalorder %s38, 1
      %p253 = por %p251, %p252
      %p255 = scmp.ne.s32.totalorder %s240, %s254
      %p256 = scmp.eq.s32.totalorder %s38, 0
      %p257 = por %p255, %p256
      %s259 = sadd.s32 %s258, 1
      %p262 = scmp.eq.s32.totalorder %s32, 1
      %p263 = scmp.ne.s32.totalorder %s258, %s260
      %p264 = scmp.eq.s32.totalorder %s32, 0
      %p265 = por %p263, %p264
      %p266 = scmp.ne.s32.totalorder %s258, %s260
      %p267 = scmp.eq.s32.totalorder %s37, 1
      %p268 = por %p266, %p267
      %p269 = scmp.ne.s32.totalorder %s260, %s261
      %p270 = scmp.eq.s32.totalorder %s37, 0
      %p271 = por %p269, %p270
      %p272 = scmp.ne.s32.totalorder %s260, %s261
      %p273 = scmp.eq.s32.totalorder %s38, 1
      %p274 = por %p272, %p273
      %p276 = scmp.ne.s32.totalorder %s261, %s275
      %p277 = scmp.eq.s32.totalorder %s38, 0
      %p278 = por %p276, %p277
      %s279 = ssub.s32 %s39, %s51
      %s280 = ssub.s32 %s40, %s47
      %s281 = sor.u32 %s279, %s280
      %p282 = scmp.eq.s32.totalorder %s281, 0
      %s284 = sadd.s32 %s283, 1
      %s285 = scalar_select %p282, %s283, %s284
      %p288 = pneg %p282
      %p289 = scmp.eq.s32.totalorder %s32, 1
      %p290 = por %p288, %p289
      %p291 = scmp.ne.s32.totalorder %s283, %s286
      %p292 = scmp.eq.s32.totalorder %s32, 0
      %p293 = por %p291, %p292
      %p294 = scmp.ne.s32.totalorder %s283, %s286
      %p295 = scmp.eq.s32.totalorder %s37, 1
      %p296 = por %p294, %p295
      %p297 = scmp.ne.s32.totalorder %s286, %s287
      %p298 = scmp.eq.s32.totalorder %s37, 0
      %p299 = por %p297, %p298
      %p300 = scmp.ne.s32.totalorder %s286, %s287
      %p301 = scmp.eq.s32.totalorder %s38, 1
      %p302 = por %p300, %p301
      %p304 = scmp.ne.s32.totalorder %s287, %s303
      %p305 = scmp.eq.s32.totalorder %s38, 0
      %p306 = por %p304, %p305
      %s307 = ssub.s32 %s39, %s51
      %s308 = ssub.s32 %s40, %s47
      %s309 = sor.u32 %s307, %s308
      %p310 = scmp.eq.s32.totalorder %s309, 0
      %s312 = sadd.s32 %s311, 1
      %s313 = scalar_select %p310, %s311, %s312
      %p316 = pneg %p310
      %p317 = scmp.eq.s32.totalorder %s32, 1
      %p318 = por %p316, %p317
      %p319 = scmp.ne.s32.totalorder %s311, %s314
      %p320 = scmp.eq.s32.totalorder %s32, 0
      %p321 = por %p319, %p320
      %p322 = scmp.ne.s32.totalorder %s311, %s314
      %p323 = scmp.eq.s32.totalorder %s37, 1
      %p324 = por %p322, %p323
      %p325 = scmp.ne.s32.totalorder %s314, %s315
      %p326 = scmp.eq.s32.totalorder %s37, 0
      %p327 = por %p325, %p326
      %p328 = scmp.ne.s32.totalorder %s314, %s315
      %p329 = scmp.eq.s32.totalorder %s38, 1
      %p330 = por %p328, %p329
      %p332 = scmp.ne.s32.totalorder %s315, %s331
      %p333 = scmp.eq.s32.totalorder %s38, 0
      %p334 = por %p332, %p333
      %p335 = scmp.le.s32.totalorder 1, %s32
      %p336 = scmp.lt.s32.totalorder %s32, 3
      %p337 = pnand %p335, %p336
      %p338 = pneg %p337
      // Predicated region
      $region9: #{tpu_custom_call.1} parent=5 // pred_check
        _
      $region10: #{tpu_custom_call.1} parent=5 // pred_check_branch
        %340 = sbr.rel (%p337) target = $region12
      $region11: #{tpu_custom_call.1} parent=5 // pred_region
        %s341 = ssub.s32 %s32, 1
        // Predicated region
        $region13: #{tpu_custom_call.1} parent=11 // pred_check
          %p342 = pneg %p145
        $region14: #{tpu_custom_call.1} parent=11 // pred_check_branch
          %344 = sbr.rel (%p342) target = $region16
        $region15: #{tpu_custom_call.1} parent=11 // pred_region
          %s346 = ssub.s32 256, 256
          %347 = vsyncadd [#allocation9], %s346
          %s348 = sshll.u32 [#allocation8], 4
          %s349 = int_to_ptr.vmem [resolvable:$true] %s348
          %354 = dma.hbm_to_vmem [thread:$0]  %s3, 256, %s349, [#allocation9], 64, 64, 4
        $region16: #{tpu_custom_call.1} parent=11 // pred_fallthru
          _
        // Predicated region
        $region17: #{tpu_custom_call.1} parent=11 // pred_check
          %p355 = pneg %p166
        $region18: #{tpu_custom_call.1} parent=11 // pred_check_branch
          %357 = sbr.rel (%p355) target = $region20
        $region19: #{tpu_custom_call.1} parent=11 // pred_region
          %s359 = ssub.s32 256, 256
          %360 = vsyncadd [#allocation9], %s359
          %s361 = sshll.u32 [#allocation10], 4
          %s362 = int_to_ptr.vmem [resolvable:$true] %s361
          %367 = dma.hbm_to_vmem [thread:$0]  %s4, 256, %s362, [#allocation9], 64, 64, 4
        $region20: #{tpu_custom_call.1} parent=11 // pred_fallthru
          _
        // Predicated region
        $region21: #{tpu_custom_call.1} parent=11 // pred_check
          %p368 = pneg %p187
        $region22: #{tpu_custom_call.1} parent=11 // pred_check_branch
          %370 = sbr.rel (%p368) target = $region24
        $region23: #{tpu_custom_call.1} parent=11 // pred_region
          %s372 = ssub.s32 256, 256
          %373 = vsyncadd [#allocation12], %s372
          %s374 = sshll.u32 [#allocation11], 4
          %s375 = int_to_ptr.vmem [resolvable:$true] %s374
          %380 = dma.hbm_to_vmem [thread:$0]  %s5, 256, %s375, [#allocation12], 64, 64, 4
        $region24: #{tpu_custom_call.1} parent=11 // pred_fallthru
          _
        // Predicated region
        $region25: #{tpu_custom_call.1} parent=11 // pred_check
          %p381 = pneg %p208
        $region26: #{tpu_custom_call.1} parent=11 // pred_check_branch
          %383 = sbr.rel (%p381) target = $region28
        $region27: #{tpu_custom_call.1} parent=11 // pred_region
          %s385 = ssub.s32 256, 256
          %386 = vsyncadd [#allocation12], %s385
          %s387 = sshll.u32 [#allocation13], 4
          %s388 = int_to_ptr.vmem [resolvable:$true] %s387
          %393 = dma.hbm_to_vmem [thread:$0]  %s6, 256, %s388, [#allocation12], 64, 64, 4
        $region28: #{tpu_custom_call.1} parent=11 // pred_fallthru
          _
        // Predicated region
        $region29: #{tpu_custom_call.1} parent=11 // pred_check
          %p394 = pneg %p229
        $region30: #{tpu_custom_call.1} parent=11 // pred_check_branch
          %396 = sbr.rel (%p394) target = $region32
        $region31: #{tpu_custom_call.1} parent=11 // pred_region
          _
        $region32: #{tpu_custom_call.1} parent=11 // pred_fallthru
          _
        // Predicated region
        $region33: #{tpu_custom_call.1} parent=11 // pred_check
          %p397 = pneg %p250
        $region34: #{tpu_custom_call.1} parent=11 // pred_check_branch
          %399 = sbr.rel (%p397) target = $region36
        $region35: #{tpu_custom_call.1} parent=11 // pred_region
          _
        $region36: #{tpu_custom_call.1} parent=11 // pred_fallthru
          _
        // Predicated region
        $region37: #{tpu_custom_call.1} parent=11 // pred_check
          %p400 = pneg %p271
        $region38: #{tpu_custom_call.1} parent=11 // pred_check_branch
          %402 = sbr.rel (%p400) target = $region40
        $region39: #{tpu_custom_call.1} parent=11 // pred_region
          _
        $region40: #{tpu_custom_call.1} parent=11 // pred_fallthru
          _
      $region12: #{tpu_custom_call.1} parent=5 // pred_fallthru
        _
      %p403 = scmp.lt.s32.totalorder %s32, 2
      // Predicated region
      $region41: #{tpu_custom_call.1} parent=5 // pred_check
        %p404 = pneg %p403
      $region42: #{tpu_custom_call.1} parent=5 // pred_check_branch
        %406 = sbr.rel (%p404) target = $region44
      $region43: #{tpu_custom_call.1} parent=5 // pred_region
        // Predicated region
        $region45: #{tpu_custom_call.1} parent=43 // pred_check
          %p407 = pneg %p66
        $region46: #{tpu_custom_call.1} parent=43 // pred_check_branch
          %409 = sbr.rel (%p407) target = $region48
        $region47: #{tpu_custom_call.1} parent=43 // pred_region
          %s410 = sand.u32 %s56, 1
          %s411 = scalar_lea.sflag [#allocation3], %s410
          %s412 = sand.u32 %s56, 1
          %s413 = smul.addr %s412, 8
          %s414 = scalar_lea.vmem [#allocation2], %s413
          %s416 = ssub.s32 128, 128
          %417 = vsyncadd %s411, %s416
          %s418 = sadd.s32 %s40, %s39
          %s419 = smul.addr %s418, 128
          %s420 = scalar_lea.hbm %s0, %s419
          %s422 = sshll.u32 %s414, 4
          %s423 = int_to_ptr.vmem [resolvable:$true] %s422
          %425 = dma.hbm_to_vmem [thread:$0]  %s420, 128, %s423, %s411
        $region48: #{tpu_custom_call.1} parent=43 // pred_fallthru
          _
        // Predicated region
        $region49: #{tpu_custom_call.1} parent=43 // pred_check
          %p426 = pneg %p92
        $region50: #{tpu_custom_call.1} parent=43 // pred_check_branch
          %428 = sbr.rel (%p426) target = $region52
        $region51: #{tpu_custom_call.1} parent=43 // pred_region
          %s429 = sand.u32 %s32, 1
          %s430 = scalar_lea.sflag [#allocation6], %s429
          %s431 = sand.u32 %s82, 1
          %s432 = smul.addr %s431, 4
          %s433 = scalar_lea.vmem [#allocation5], %s432
          %s435 = ssub.s32 64, 64
          %436 = vsyncadd %s430, %s435
          %s437 = smul.addr %s39, 64
          %s438 = scalar_lea.hbm %s1, %s437
          %s440 = sshll.u32 %s433, 4
          %s441 = int_to_ptr.vmem [resolvable:$true] %s440
          %443 = dma.hbm_to_vmem [thread:$0]  %s438, 64, %s441, %s430
        $region52: #{tpu_custom_call.1} parent=43 // pred_fallthru
          _
        // Predicated region
        $region53: #{tpu_custom_call.1} parent=43 // pred_check
          %p444 = pneg %p118
        $region54: #{tpu_custom_call.1} parent=43 // pred_check_branch
          %446 = sbr.rel (%p444) target = $region56
        $region55: #{tpu_custom_call.1} parent=43 // pred_region
          %s447 = sand.u32 %s32, 1
          %s448 = scalar_lea.sflag [#allocation6], %s447
          %s449 = sand.u32 %s108, 1
          %s450 = smul.addr %s449, 4
          %s451 = scalar_lea.vmem [#allocation7], %s450
          %s453 = ssub.s32 64, 64
          %454 = vsyncadd %s448, %s453
          %s455 = smul.addr %s39, 64
          %s456 = scalar_lea.hbm %s2, %s455
          %s458 = sshll.u32 %s451, 4
          %s459 = int_to_ptr.vmem [resolvable:$true] %s458
          %461 = dma.hbm_to_vmem [thread:$0]  %s456, 64, %s459, %s448
        $region56: #{tpu_custom_call.1} parent=43 // pred_fallthru
          _
      $region44: #{tpu_custom_call.1} parent=5 // pred_fallthru
        _
      %p462 = scmp.le.s32.totalorder 1, %s32
      %p463 = scmp.lt.s32.totalorder %s32, 3
      %p464 = pnand %p462, %p463
      %p465 = pneg %p464
      // Predicated region
      $region57: #{tpu_custom_call.1} parent=5 // pred_check
        _
      $region58: #{tpu_custom_call.1} parent=5 // pred_check_branch
        %467 = sbr.rel (%p464) target = $region60
      $region59: #{tpu_custom_call.1} parent=5 // pred_region
        %s468 = ssub.s32 %s32, 1
        %s469 = sand.u32 %s59, 1
        %s470 = scalar_lea.sflag [#allocation3], %s469
        %s471 = sand.u32 %s59, 1
        %s472 = smul.addr %s471, 8
        %s473 = scalar_lea.vmem [#allocation2], %s472
        // Predicated region
        $region61: #{tpu_custom_call.1} parent=59 // pred_check
          %p474 = pneg %p72
        $region62: #{tpu_custom_call.1} parent=59 // pred_check_branch
          %476 = sbr.rel (%p474) target = $region64
        $region63: #{tpu_custom_call.1} parent=59 // pred_region
          %477 = dma.done %s470, 128
        $region64: #{tpu_custom_call.1} parent=59 // pred_fallthru
          _
        %s478 = sand.u32 %s37, 1
        %s479 = scalar_lea.sflag [#allocation6], %s478
        %s480 = sand.u32 %s85, 1
        %s481 = smul.addr %s480, 4
        %s482 = scalar_lea.vmem [#allocation5], %s481
        // Predicated region
        $region65: #{tpu_custom_call.1} parent=59 // pred_check
          %p483 = pneg %p98
        $region66: #{tpu_custom_call.1} parent=59 // pred_check_branch
          %485 = sbr.rel (%p483) target = $region68
        $region67: #{tpu_custom_call.1} parent=59 // pred_region
          %486 = dma.done %s479, 64
        $region68: #{tpu_custom_call.1} parent=59 // pred_fallthru
          _
        %s487 = sand.u32 %s37, 1
        %s488 = scalar_lea.sflag [#allocation6], %s487
        %s489 = sand.u32 %s111, 1
        %s490 = smul.addr %s489, 4
        %s491 = scalar_lea.vmem [#allocation7], %s490
        // Predicated region
        $region69: #{tpu_custom_call.1} parent=59 // pred_check
          %p492 = pneg %p124
        $region70: #{tpu_custom_call.1} parent=59 // pred_check_branch
          %494 = sbr.rel (%p492) target = $region72
        $region71: #{tpu_custom_call.1} parent=59 // pred_region
          %495 = dma.done %s488, 64
        $region72: #{tpu_custom_call.1} parent=59 // pred_fallthru
          _
        // Predicated region
        $region73: #{tpu_custom_call.1} parent=59 // pred_check
          %p496 = pneg %p145
        $region74: #{tpu_custom_call.1} parent=59 // pred_check_branch
          %498 = sbr.rel (%p496) target = $region76
        $region75: #{tpu_custom_call.1} parent=59 // pred_region
          %499 = dma.done [#allocation9], 256
        $region76: #{tpu_custom_call.1} parent=59 // pred_fallthru
          _
        // Predicated region
        $region77: #{tpu_custom_call.1} parent=59 // pred_check
          %p500 = pneg %p166
        $region78: #{tpu_custom_call.1} parent=59 // pred_check_branch
          %502 = sbr.rel (%p500) target = $region80
        $region79: #{tpu_custom_call.1} parent=59 // pred_region
          %503 = dma.done [#allocation9], 256
        $region80: #{tpu_custom_call.1} parent=59 // pred_fallthru
          _
        // Predicated region
        $region81: #{tpu_custom_call.1} parent=59 // pred_check
          %p504 = pneg %p187
        $region82: #{tpu_custom_call.1} parent=59 // pred_check_branch
          %506 = sbr.rel (%p504) target = $region84
        $region83: #{tpu_custom_call.1} parent=59 // pred_region
          %507 = dma.done [#allocation12], 256
        $region84: #{tpu_custom_call.1} parent=59 // pred_fallthru
          _
        // Predicated region
        $region85: #{tpu_custom_call.1} parent=59 // pred_check
          %p508 = pneg %p208
        $region86: #{tpu_custom_call.1} parent=59 // pred_check_branch
          %510 = sbr.rel (%p508) target = $region88
        $region87: #{tpu_custom_call.1} parent=59 // pred_region
          %511 = dma.done [#allocation12], 256
        $region88: #{tpu_custom_call.1} parent=59 // pred_fallthru
          _
        %s512 = sand.u32 %s59, 1
        %s513 = scalar_lea.sflag [#allocation3], %s512
        %s514 = sand.u32 %s59, 1
        %s515 = smul.addr %s514, 8
        %s516 = scalar_lea.vmem [#allocation2], %s515
        %p517 = pneg %p72
        %p518 = pneg %p69
        %s519 = sand.u32 %s37, 1
        %s520 = scalar_lea.sflag [#allocation6], %s519
        %s521 = sand.u32 %s85, 1
        %s522 = smul.addr %s521, 4
        %s523 = scalar_lea.vmem [#allocation5], %s522
        %p524 = pneg %p98
        %p525 = pneg %p95
        %s526 = sand.u32 %s37, 1
        %s527 = scalar_lea.sflag [#allocation6], %s526
        %s528 = sand.u32 %s111, 1
        %s529 = smul.addr %s528, 4
        %s530 = scalar_lea.vmem [#allocation7], %s529
        %p531 = pneg %p124
        %p532 = pneg %p121
        %p533 = pneg %p145
        %p534 = pneg %p142
        %p535 = pneg %p166
        %p536 = pneg %p163
        %p537 = pneg %p187
        %p538 = pneg %p184
        %p539 = pneg %p208
        %p540 = pneg %p205
        %p541 = pneg %p229
        %p542 = pneg %p226
        %p543 = pneg %p250
        %p544 = pneg %p247
        %p545 = pneg %p271
        %p546 = pneg %p268
        %p547 = pneg %p299
        %p548 = pneg %p296
        %s549 = sand.u32 %s286, 1
        %s550 = scalar_lea.sflag [#allocation4], %s549
        %s551 = sand.u32 %s286, 1
        %s552 = smul.addr %s551, 8
        %s553 = scalar_lea.vmem [#allocation14], %s552
        %p554 = pneg %p327
        %p555 = pneg %p324
        %s556 = sand.u32 %s314, 1
        %s557 = scalar_lea.sflag [#allocation16], %s556
        %s558 = sand.u32 %s314, 1
        %s559 = smul.addr %s558, 16
        %s560 = scalar_lea.vmem [#allocation15], %s559
        %v562 = vld [vmem:[%s473] sm:$0xff]
        %v563 = vld [vmem:[%s482] sm:$0xf]
        %v564 = vld [vmem:[%s491] sm:$0xf]
        %v565 = vpack.c.bf16 %v562, %v562
        %v566 = vld [vmem:[#allocation8] sm:$0xf]
        %v567 = vld [vmem:[#allocation8 + $0x4] sm:$0xf]
        %v568 = vld [vmem:[#allocation8 + $0x8] sm:$0xf]
        %v569 = vld [vmem:[#allocation8 + $0xc] sm:$0xf]
        %v574 = vunpack.c.l.b16 %v566
        %v575 = vunpack.c.l.b16 %v567
        %v576 = vunpack.c.l.b16 %v568
        %v577 = vunpack.c.l.b16 %v569
        %v578 = vpack.c.b16 %v575, %v574
        %v579 = vpack.c.b16 %v577, %v576
        %vm582 = vcmask 261120
        %v584 = vsel %vm582, %v565, 0
        %586 = vmatprep.subr.bf16.mxu0 0
        %587 = vmatpush1.bf16.msra.mxu0 0
        %588 = vmatprep.subr.bf16.mxu0 0
        %589 = vmatpush1.bf16.msra.mxu0 0
        %590 = vmatprep.subr.bf16.mxu0 0
        %591 = vmatpush1.bf16.msra.mxu0 0
        %592 = vmatprep.subr.bf16.mxu0 0
        %593 = vmatpush1.bf16.msra.mxu0 0
        %594 = vmatprep.subr.bf16.mxu0 0
        %595 = vmatpush1.bf16.msra.mxu0 0
        %596 = vmatprep.subr.bf16.mxu0 0
        %597 = vmatpush1.bf16.msra.mxu0 0
        %598 = vmatprep.subr.bf16.mxu0 0
        %599 = vmatpush1.bf16.msra.mxu0 %v579
        %600 = vmatprep.subr.bf16.mxu0 0
        %601 = vmatpush1.bf16.msra.mxu0 %v578
        %602 = vmatprep.subr.bf16.mxu0 0
        %603 = vmatpush2.bf16.msra.mxu0 0
        %604 = vmatprep.subr.bf16.mxu0 0
        %605 = vmatpush2.bf16.msra.mxu0 0
        %606 = vmatprep.subr.bf16.mxu0 0
        %607 = vmatpush2.bf16.msra.mxu0 0
        %608 = vmatprep.subr.bf16.mxu0 0
        %609 = vmatpush2.bf16.msra.mxu0 0
        %610 = vmatprep.subr.bf16.mxu0 0
        %611 = vmatpush2.bf16.msra.mxu0 0
        %612 = vmatprep.subr.bf16.mxu0 0
        %613 = vmatpush2.bf16.msra.mxu0 0
        %614 = vmatprep.subr.bf16.mxu0 0
        %615 = vmatpush2.bf16.msra.mxu0 0
        %616 = vmatprep.subr.bf16.mxu0 0
        %617 = vmatpush2.bf16.msra.mxu0 0
        %618 = vmatprep.mubr.bf16.mxu0 0
        %619 = vmatmul.mubr.bf16.gmra.mxu0 %v584
        %v620 = vpop.f32.mrf.mxu0
        %v621 = vadd.f32 0.0, %v620
        %v622 = vpop.f32.mrf.mxu0
        %v623 = vpop.f32.mrf.mxu0
        %v624 = vpop.f32.mrf.mxu0
        %625 = vdwg.mxu0
        %v626 = vld [vmem:[#allocation10] sm:$0xf]
        %v627 = vld [vmem:[#allocation10 + $0x4] sm:$0xf]
        %v628 = vld [vmem:[#allocation10 + $0x8] sm:$0xf]
        %v629 = vld [vmem:[#allocation10 + $0xc] sm:$0xf]
        %v634 = vunpack.c.l.b16 %v626
        %v635 = vunpack.c.l.b16 %v627
        %v636 = vunpack.c.l.b16 %v628
        %v637 = vunpack.c.l.b16 %v629
        %v638 = vpack.c.b16 %v635, %v634
        %v639 = vpack.c.b16 %v637, %v636
        %v643 = vsel %vm582, %v563, 0
        %645 = vmatprep.subr.bf16.mxu0 0
        %646 = vmatpush1.bf16.msra.mxu0 0
        %647 = vmatprep.subr.bf16.mxu0 0
        %648 = vmatpush1.bf16.msra.mxu0 0
        %649 = vmatprep.subr.bf16.mxu0 0
        %650 = vmatpush1.bf16.msra.mxu0 0
        %651 = vmatprep.subr.bf16.mxu0 0
        %652 = vmatpush1.bf16.msra.mxu0 0
        %653 = vmatprep.subr.bf16.mxu0 0
        %654 = vmatpush1.bf16.msra.mxu0 0
        %655 = vmatprep.subr.bf16.mxu0 0
        %656 = vmatpush1.bf16.msra.mxu0 0
        %657 = vmatprep.subr.bf16.mxu0 0
        %658 = vmatpush1.bf16.msra.mxu0 %v639
        %659 = vmatprep.subr.bf16.mxu0 0
        %660 = vmatpush1.bf16.msra.mxu0 %v638
        %661 = vmatprep.subr.bf16.mxu0 0
        %662 = vmatpush2.bf16.msra.mxu0 0
        %663 = vmatprep.subr.bf16.mxu0 0
        %664 = vmatpush2.bf16.msra.mxu0 0
        %665 = vmatprep.subr.bf16.mxu0 0
        %666 = vmatpush2.bf16.msra.mxu0 0
        %667 = vmatprep.subr.bf16.mxu0 0
        %668 = vmatpush2.bf16.msra.mxu0 0
        %669 = vmatprep.subr.bf16.mxu0 0
        %670 = vmatpush2.bf16.msra.mxu0 0
        %671 = vmatprep.subr.bf16.mxu0 0
        %672 = vmatpush2.bf16.msra.mxu0 0
        %673 = vmatprep.subr.bf16.mxu0 0
        %674 = vmatpush2.bf16.msra.mxu0 0
        %675 = vmatprep.subr.bf16.mxu0 0
        %676 = vmatpush2.bf16.msra.mxu0 0
        %677 = vmatprep.mubr.bf16.mxu0 0
        %678 = vmatmul.mubr.bf16.gmra.mxu0 %v643
        %v679 = vpop.f32.mrf.mxu0
        %v680 = vadd.f32 0.0, %v679
        %v681 = vpop.f32.mrf.mxu0
        %v682 = vpop.f32.mrf.mxu0
        %v683 = vpop.f32.mrf.mxu0
        %684 = vdwg.mxu0
        %v685 = vld [vmem:[#allocation11] sm:$0xf]
        %v686 = vld [vmem:[#allocation11 + $0x4] sm:$0xf]
        %v687 = vld [vmem:[#allocation11 + $0x8] sm:$0xf]
        %v688 = vld [vmem:[#allocation11 + $0xc] sm:$0xf]
        %v693 = vunpack.c.l.b16 %v685
        %v694 = vunpack.c.l.b16 %v686
        %v695 = vunpack.c.l.b16 %v687
        %v696 = vunpack.c.l.b16 %v688
        %v697 = vpack.c.b16 %v694, %v693
        %v698 = vpack.c.b16 %v696, %v695
        %v702 = vsel %vm582, %v564, 0
        %704 = vmatprep.subr.bf16.mxu0 0
        %705 = vmatpush1.bf16.msra.mxu0 0
        %706 = vmatprep.subr.bf16.mxu0 0
        %707 = vmatpush1.bf16.msra.mxu0 0
        %708 = vmatprep.subr.bf16.mxu0 0
        %709 = vmatpush1.bf16.msra.mxu0 0
        %710 = vmatprep.subr.bf16.mxu0 0
        %711 = vmatpush1.bf16.msra.mxu0 0
        %712 = vmatprep.subr.bf16.mxu0 0
        %713 = vmatpush1.bf16.msra.mxu0 0
        %714 = vmatprep.subr.bf16.mxu0 0
        %715 = vmatpush1.bf16.msra.mxu0 0
        %716 = vmatprep.subr.bf16.mxu0 0
        %717 = vmatpush1.bf16.msra.mxu0 %v698
        %718 = vmatprep.subr.bf16.mxu0 0
        %719 = vmatpush1.bf16.msra.mxu0 %v697
        %720 = vmatprep.subr.bf16.mxu0 0
        %721 = vmatpush2.bf16.msra.mxu0 0
        %722 = vmatprep.subr.bf16.mxu0 0
        %723 = vmatpush2.bf16.msra.mxu0 0
        %724 = vmatprep.subr.bf16.mxu0 0
        %725 = vmatpush2.bf16.msra.mxu0 0
        %726 = vmatprep.subr.bf16.mxu0 0
        %727 = vmatpush2.bf16.msra.mxu0 0
        %728 = vmatprep.subr.bf16.mxu0 0
        %729 = vmatpush2.bf16.msra.mxu0 0
        %730 = vmatprep.subr.bf16.mxu0 0
        %731 = vmatpush2.bf16.msra.mxu0 0
        %732 = vmatprep.subr.bf16.mxu0 0
        %733 = vmatpush2.bf16.msra.mxu0 0
        %734 = vmatprep.subr.bf16.mxu0 0
        %735 = vmatpush2.bf16.msra.mxu0 0
        %736 = vmatprep.mubr.bf16.mxu0 0
        %737 = vmatmul.mubr.bf16.gmra.mxu0 %v702
        %v738 = vpop.f32.mrf.mxu0
        %v739 = vadd.f32 0.0, %v738
        %v740 = vpop.f32.mrf.mxu0
        %v741 = vpop.f32.mrf.mxu0
        %v742 = vpop.f32.mrf.mxu0
        %743 = vdwg.mxu0
        %v744 = vpack.c.bf16 %v621, %v621
        %v745 = vpack.c.bf16 %v680, %v680
        %v746 = vpack.c.bf16 %v739, %v739
        %vm747 = vcmask 64512
        %v749 = vsel %vm747, %v744, 0
        %v752 = vsel %vm747, %v745, 0
        %754 = vmatprep.subr.bf16.mxu0 0
        %755 = vmatpush1.bf16.xpose.msra.mxu0 0
        %756 = vmatprep.subr.bf16.mxu0 0
        %757 = vmatpush1.bf16.xpose.msra.mxu0 0
        %758 = vmatprep.subr.bf16.mxu0 0
        %759 = vmatpush1.bf16.xpose.msra.mxu0 0
        %760 = vmatprep.subr.bf16.mxu0 0
        %761 = vmatpush1.bf16.xpose.msra.mxu0 0
        %762 = vmatprep.subr.bf16.mxu0 0
        %763 = vmatpush1.bf16.xpose.msra.mxu0 0
        %764 = vmatprep.subr.bf16.mxu0 0
        %765 = vmatpush1.bf16.xpose.msra.mxu0 0
        %766 = vmatprep.subr.bf16.mxu0 0
        %767 = vmatpush1.bf16.xpose.msra.mxu0 0
        %768 = vmatprep.subr.bf16.mxu0 0
        %769 = vmatpush1.bf16.xpose.msra.mxu0 %v752
        %770 = vmatprep.subr.bf16.mxu0 0
        %771 = vmatpush2.bf16.xpose.msra.mxu0 0
        %772 = vmatprep.subr.bf16.mxu0 0
        %773 = vmatpush2.bf16.xpose.msra.mxu0 0
        %774 = vmatprep.subr.bf16.mxu0 0
        %775 = vmatpush2.bf16.xpose.msra.mxu0 0
        %776 = vmatprep.subr.bf16.mxu0 0
        %777 = vmatpush2.bf16.xpose.msra.mxu0 0
        %778 = vmatprep.subr.bf16.mxu0 0
        %779 = vmatpush2.bf16.xpose.msra.mxu0 0
        %780 = vmatprep.subr.bf16.mxu0 0
        %781 = vmatpush2.bf16.xpose.msra.mxu0 0
        %782 = vmatprep.subr.bf16.mxu0 0
        %783 = vmatpush2.bf16.xpose.msra.mxu0 0
        %784 = vmatprep.subr.bf16.mxu0 0
        %785 = vmatpush2.bf16.xpose.msra.mxu0 0
        %786 = vmatprep.mubr.bf16.mxu0 0
        %787 = vmatmul.mubr.bf16.gmra.mxu0 %v749
        %v788 = vpop.f32.mrf.mxu0
        %v789 = vadd.f32 0.0, %v788
        %v790 = vpop.f32.mrf.mxu0
        %v791 = vpop.f32.mrf.mxu0
        %v792 = vpop.f32.mrf.mxu0
        %793 = vdwg.mxu0
        %v794 = vsel %vm747, %v789, -inf
        %795 = vmax.xlane.f32.xlu0 %v794
        %v796 = vpop.xlane.xlu0 %795
        %v797 = vsub.f32 %v789, %v796
        %v798 = vmul.f32 %v797, 1.442695
        %v799 = vpow.pop %v798
        %v800 = vsel %vm747, %v799, 0.0
        %801 = vadd.xlane.f32.xlu0 %v800
        %v802 = vpop.xlane.xlu0 %801
        %v803 = vrcp.pop %v802
        %v804 = vmul.f32 %v799, %v803
        %v805 = vpack.c.bf16 %v804, %v804
        %vm806 = vcmask 60416
        %807 = vst.msk [vmem:[%s560] sm:$0xf] %vm806, %v805
        %v809 = vsel %vm747, %v805, 0
        %vm811 = vcmask 1043456
        %v813 = vsel %vm811, %v746, 0
        %815 = vmatprep.subr.bf16.mxu0 0
        %816 = vmatpush1.bf16.msra.mxu0 0
        %817 = vmatprep.subr.bf16.mxu0 0
        %818 = vmatpush1.bf16.msra.mxu0 0
        %819 = vmatprep.subr.bf16.mxu0 0
        %820 = vmatpush1.bf16.msra.mxu0 0
        %821 = vmatprep.subr.bf16.mxu0 0
        %822 = vmatpush1.bf16.msra.mxu0 0
        %823 = vmatprep.subr.bf16.mxu0 0
        %824 = vmatpush1.bf16.msra.mxu0 0
        %825 = vmatprep.subr.bf16.mxu0 0
        %826 = vmatpush1.bf16.msra.mxu0 0
        %827 = vmatprep.subr.bf16.mxu0 0
        %828 = vmatpush1.bf16.msra.mxu0 0
        %829 = vmatprep.subr.bf16.mxu0 0
        %830 = vmatpush1.bf16.msra.mxu0 %v813
        %831 = vmatprep.subr.bf16.mxu0 0
        %832 = vmatpush2.bf16.msra.mxu0 0
        %833 = vmatprep.subr.bf16.mxu0 0
        %834 = vmatpush2.bf16.msra.mxu0 0
        %835 = vmatprep.subr.bf16.mxu0 0
        %836 = vmatpush2.bf16.msra.mxu0 0
        %837 = vmatprep.subr.bf16.mxu0 0
        %838 = vmatpush2.bf16.msra.mxu0 0
        %839 = vmatprep.subr.bf16.mxu0 0
        %840 = vmatpush2.bf16.msra.mxu0 0
        %841 = vmatprep.subr.bf16.mxu0 0
        %842 = vmatpush2.bf16.msra.mxu0 0
        %843 = vmatprep.subr.bf16.mxu0 0
        %844 = vmatpush2.bf16.msra.mxu0 0
        %845 = vmatprep.subr.bf16.mxu0 0
        %846 = vmatpush2.bf16.msra.mxu0 0
        %847 = vmatprep.mubr.bf16.mxu0 0
        %848 = vmatmul.mubr.bf16.gmra.mxu0 %v809
        %v849 = vpop.f32.mrf.mxu0
        %v850 = vadd.f32 0.0, %v849
        %v851 = vpop.f32.mrf.mxu0
        %v852 = vpop.f32.mrf.mxu0
        %v853 = vpop.f32.mrf.mxu0
        %854 = vdwg.mxu0
        %v855 = vpack.c.bf16 %v850, %v850
        %v856 = vld [vmem:[#allocation13] sm:$0xf]
        %858 = vrot.lane.b32.xlu0 %v744, 120
        %v859 = vpop.permute.xlu0 %858
        %861 = vrot.lane.b32.xlu0 %v745, 120
        %v862 = vpop.permute.xlu0 %861
        %v864 = vsel %vm747, %v859, 0
        %v867 = vsel %vm747, %v862, 0
        %869 = vmatprep.subr.bf16.mxu0 0
        %870 = vmatpush1.bf16.xpose.msra.mxu0 0
        %871 = vmatprep.subr.bf16.mxu0 0
        %872 = vmatpush1.bf16.xpose.msra.mxu0 0
        %873 = vmatprep.subr.bf16.mxu0 0
        %874 = vmatpush1.bf16.xpose.msra.mxu0 0
        %875 = vmatprep.subr.bf16.mxu0 0
        %876 = vmatpush1.bf16.xpose.msra.mxu0 0
        %877 = vmatprep.subr.bf16.mxu0 0
        %878 = vmatpush1.bf16.xpose.msra.mxu0 0
        %879 = vmatprep.subr.bf16.mxu0 0
        %880 = vmatpush1.bf16.xpose.msra.mxu0 0
        %881 = vmatprep.subr.bf16.mxu0 0
        %882 = vmatpush1.bf16.xpose.msra.mxu0 0
        %883 = vmatprep.subr.bf16.mxu0 0
        %884 = vmatpush1.bf16.xpose.msra.mxu0 %v867
        %885 = vmatprep.subr.bf16.mxu0 0
        %886 = vmatpush2.bf16.xpose.msra.mxu0 0
        %887 = vmatprep.subr.bf16.mxu0 0
        %888 = vmatpush2.bf16.xpose.msra.mxu0 0
        %889 = vmatprep.subr.bf16.mxu0 0
        %890 = vmatpush2.bf16.xpose.msra.mxu0 0
        %891 = vmatprep.subr.bf16.mxu0 0
        %892 = vmatpush2.bf16.xpose.msra.mxu0 0
        %893 = vmatprep.subr.bf16.mxu0 0
        %894 = vmatpush2.bf16.xpose.msra.mxu0 0
        %895 = vmatprep.subr.bf16.mxu0 0
        %896 = vmatpush2.bf16.xpose.msra.mxu0 0
        %897 = vmatprep.subr.bf16.mxu0 0
        %898 = vmatpush2.bf16.xpose.msra.mxu0 0
        %899 = vmatprep.subr.bf16.mxu0 0
        %900 = vmatpush2.bf16.xpose.msra.mxu0 0
        %901 = vmatprep.mubr.bf16.mxu0 0
        %902 = vmatmul.mubr.bf16.gmra.mxu0 %v864
        %v903 = vpop.f32.mrf.mxu0
        %v904 = vadd.f32 0.0, %v903
        %v905 = vpop.f32.mrf.mxu0
        %v906 = vpop.f32.mrf.mxu0
        %v907 = vpop.f32.mrf.mxu0
        %908 = vdwg.mxu0
        %v909 = vsel %vm747, %v904, -inf
        %910 = vmax.xlane.f32.xlu0 %v909
        %v911 = vpop.xlane.xlu0 %910
        %v912 = vsub.f32 %v904, %v911
        %v913 = vmul.f32 %v912, 1.442695
        %v914 = vpow.pop %v913
        %v915 = vsel %vm747, %v914, 0.0
        %916 = vadd.xlane.f32.xlu0 %v915
        %v917 = vpop.xlane.xlu0 %916
        %v918 = vrcp.pop %v917
        %v919 = vmul.f32 %v914, %v918
        %v920 = vpack.c.bf16 %v919, %v919
        %s921 = scalar_lea.vmem %s560, 4 [#allocation15]
        %922 = vst.msk [vmem:[%s921] sm:$0xf] %vm806, %v920
        %924 = vrot.lane.b32.xlu0 %v746, 120
        %v925 = vpop.permute.xlu0 %924
        %v927 = vsel %vm747, %v920, 0
        %v930 = vsel %vm811, %v925, 0
        %932 = vmatprep.subr.bf16.mxu0 0
        %933 = vmatpush1.bf16.msra.mxu0 0
        %934 = vmatprep.subr.bf16.mxu0 0
        %935 = vmatpush1.bf16.msra.mxu0 0
        %936 = vmatprep.subr.bf16.mxu0 0
        %937 = vmatpush1.bf16.msra.mxu0 0
        %938 = vmatprep.subr.bf16.mxu0 0
        %939 = vmatpush1.bf16.msra.mxu0 0
        %940 = vmatprep.subr.bf16.mxu0 0
        %941 = vmatpush1.bf16.msra.mxu0 0
        %942 = vmatprep.subr.bf16.mxu0 0
        %943 = vmatpush1.bf16.msra.mxu0 0
        %944 = vmatprep.subr.bf16.mxu0 0
        %945 = vmatpush1.bf16.msra.mxu0 0
        %946 = vmatprep.subr.bf16.mxu0 0
        %947 = vmatpush1.bf16.msra.mxu0 %v930
        %948 = vmatprep.subr.bf16.mxu0 0
        %949 = vmatpush2.bf16.msra.mxu0 0
        %950 = vmatprep.subr.bf16.mxu0 0
        %951 = vmatpush2.bf16.msra.mxu0 0
        %952 = vmatprep.subr.bf16.mxu0 0
        %953 = vmatpush2.bf16.msra.mxu0 0
        %954 = vmatprep.subr.bf16.mxu0 0
        %955 = vmatpush2.bf16.msra.mxu0 0
        %956 = vmatprep.subr.bf16.mxu0 0
        %957 = vmatpush2.bf16.msra.mxu0 0
        %958 = vmatprep.subr.bf16.mxu0 0
        %959 = vmatpush2.bf16.msra.mxu0 0
        %960 = vmatprep.subr.bf16.mxu0 0
        %961 = vmatpush2.bf16.msra.mxu0 0
        %962 = vmatprep.subr.bf16.mxu0 0
        %963 = vmatpush2.bf16.msra.mxu0 0
        %964 = vmatprep.mubr.bf16.mxu0 0
        %965 = vmatmul.mubr.bf16.gmra.mxu0 %v927
        %v966 = vpop.f32.mrf.mxu0
        %v967 = vadd.f32 0.0, %v966
        %v968 = vpop.f32.mrf.mxu0
        %v969 = vpop.f32.mrf.mxu0
        %v970 = vpop.f32.mrf.mxu0
        %971 = vdwg.mxu0
        %v972 = vpack.c.bf16 %v967, %v967
        %v973 = vld [vmem:[#allocation13 + $0x4] sm:$0xf]
        %v975 = vsel %vm747, %v972, 0
        %v978 = vsel %vm811, %v973, 0
        %980 = vmatprep.subr.bf16.mxu0 0
        %981 = vmatpush1.bf16.msra.mxu0 0
        %982 = vmatprep.subr.bf16.mxu0 0
        %983 = vmatpush1.bf16.msra.mxu0 0
        %984 = vmatprep.subr.bf16.mxu0 0
        %985 = vmatpush1.bf16.msra.mxu0 0
        %986 = vmatprep.subr.bf16.mxu0 0
        %987 = vmatpush1.bf16.msra.mxu0 0
        %988 = vmatprep.subr.bf16.mxu0 0
        %989 = vmatpush1.bf16.msra.mxu0 0
        %990 = vmatprep.subr.bf16.mxu0 0
        %991 = vmatpush1.bf16.msra.mxu0 0
        %992 = vmatprep.subr.bf16.mxu0 0
        %993 = vmatpush1.bf16.msra.mxu0 0
        %994 = vmatprep.subr.bf16.mxu0 0
        %995 = vmatpush1.bf16.msra.mxu0 %v978
        %996 = vmatprep.subr.bf16.mxu0 0
        %997 = vmatpush2.bf16.msra.mxu0 0
        %998 = vmatprep.subr.bf16.mxu0 0
        %999 = vmatpush2.bf16.msra.mxu0 0
        %1000 = vmatprep.subr.bf16.mxu0 0
        %1001 = vmatpush2.bf16.msra.mxu0 0
        %1002 = vmatprep.subr.bf16.mxu0 0
        %1003 = vmatpush2.bf16.msra.mxu0 0
        %1004 = vmatprep.subr.bf16.mxu0 0
        %1005 = vmatpush2.bf16.msra.mxu0 0
        %1006 = vmatprep.subr.bf16.mxu0 0
        %1007 = vmatpush2.bf16.msra.mxu0 0
        %1008 = vmatprep.subr.bf16.mxu0 0
        %1009 = vmatpush2.bf16.msra.mxu0 0
        %1010 = vmatprep.subr.bf16.mxu0 0
        %1011 = vmatpush2.bf16.msra.mxu0 0
        %1012 = vmatprep.mubr.bf16.mxu0 0
        %1013 = vmatmul.mubr.bf16.gmra.mxu0 %v975
        %v1014 = vpop.f32.mrf.mxu0
        %v1015 = vadd.f32 0.0, %v1014
        %v1016 = vpop.f32.mrf.mxu0
        %v1017 = vpop.f32.mrf.mxu0
        %v1018 = vpop.f32.mrf.mxu0
        %1019 = vdwg.mxu0
        %v1021 = vsel %vm747, %v855, 0
        %v1024 = vsel %vm811, %v856, 0
        %1026 = vmatprep.subr.bf16.mxu0 0
        %1027 = vmatpush1.bf16.msra.mxu0 0
        %1028 = vmatprep.subr.bf16.mxu0 0
        %1029 = vmatpush1.bf16.msra.mxu0 0
        %1030 = vmatprep.subr.bf16.mxu0 0
        %1031 = vmatpush1.bf16.msra.mxu0 0
        %1032 = vmatprep.subr.bf16.mxu0 0
        %1033 = vmatpush1.bf16.msra.mxu0 0
        %1034 = vmatprep.subr.bf16.mxu0 0
        %1035 = vmatpush1.bf16.msra.mxu0 0
        %1036 = vmatprep.subr.bf16.mxu0 0
        %1037 = vmatpush1.bf16.msra.mxu0 0
        %1038 = vmatprep.subr.bf16.mxu0 0
        %1039 = vmatpush1.bf16.msra.mxu0 0
        %1040 = vmatprep.subr.bf16.mxu0 0
        %1041 = vmatpush1.bf16.msra.mxu0 %v1024
        %1042 = vmatprep.subr.bf16.mxu0 0
        %1043 = vmatpush2.bf16.msra.mxu0 0
        %1044 = vmatprep.subr.bf16.mxu0 0
        %1045 = vmatpush2.bf16.msra.mxu0 0
        %1046 = vmatprep.subr.bf16.mxu0 0
        %1047 = vmatpush2.bf16.msra.mxu0 0
        %1048 = vmatprep.subr.bf16.mxu0 0
        %1049 = vmatpush2.bf16.msra.mxu0 0
        %1050 = vmatprep.subr.bf16.mxu0 0
        %1051 = vmatpush2.bf16.msra.mxu0 0
        %1052 = vmatprep.subr.bf16.mxu0 0
        %1053 = vmatpush2.bf16.msra.mxu0 0
        %1054 = vmatprep.subr.bf16.mxu0 0
        %1055 = vmatpush2.bf16.msra.mxu0 0
        %1056 = vmatprep.subr.bf16.mxu0 0
        %1057 = vmatpush2.bf16.msra.mxu0 0
        %1058 = vmatprep.mubr.bf16.mxu0 0
        %1059 = vmatmul.mubr.bf16.gmra.mxu0 %v1021
        %v1060 = vpop.f32.mrf.mxu0
        %v1061 = vadd.f32 %v1015, %v1060
        %v1062 = vpop.f32.mrf.mxu0
        %v1063 = vpop.f32.mrf.mxu0
        %v1064 = vpop.f32.mrf.mxu0
        %1065 = vdwg.mxu0
        %1066 = vrot.lane.b32.xlu0 %v744, 112
        %v1067 = vpop.permute.xlu0 %1066
        %1068 = vrot.lane.b32.xlu0 %v745, 112
        %v1069 = vpop.permute.xlu0 %1068
        %v1071 = vsel %vm747, %v1067, 0
        %v1074 = vsel %vm747, %v1069, 0
        %1076 = vmatprep.subr.bf16.mxu0 0
        %1077 = vmatpush1.bf16.xpose.msra.mxu0 0
        %1078 = vmatprep.subr.bf16.mxu0 0
        %1079 = vmatpush1.bf16.xpose.msra.mxu0 0
        %1080 = vmatprep.subr.bf16.mxu0 0
        %1081 = vmatpush1.bf16.xpose.msra.mxu0 0
        %1082 = vmatprep.subr.bf16.mxu0 0
        %1083 = vmatpush1.bf16.xpose.msra.mxu0 0
        %1084 = vmatprep.subr.bf16.mxu0 0
        %1085 = vmatpush1.bf16.xpose.msra.mxu0 0
        %1086 = vmatprep.subr.bf16.mxu0 0
        %1087 = vmatpush1.bf16.xpose.msra.mxu0 0
        %1088 = vmatprep.subr.bf16.mxu0 0
        %1089 = vmatpush1.bf16.xpose.msra.mxu0 0
        %1090 = vmatprep.subr.bf16.mxu0 0
        %1091 = vmatpush1.bf16.xpose.msra.mxu0 %v1074
        %1092 = vmatprep.subr.bf16.mxu0 0
        %1093 = vmatpush2.bf16.xpose.msra.mxu0 0
        %1094 = vmatprep.subr.bf16.mxu0 0
        %1095 = vmatpush2.bf16.xpose.msra.mxu0 0
        %1096 = vmatprep.subr.bf16.mxu0 0
        %1097 = vmatpush2.bf16.xpose.msra.mxu0 0
        %1098 = vmatprep.subr.bf16.mxu0 0
        %1099 = vmatpush2.bf16.xpose.msra.mxu0 0
        %1100 = vmatprep.subr.bf16.mxu0 0
        %1101 = vmatpush2.bf16.xpose.msra.mxu0 0
        %1102 = vmatprep.subr.bf16.mxu0 0
        %1103 = vmatpush2.bf16.xpose.msra.mxu0 0
        %1104 = vmatprep.subr.bf16.mxu0 0
        %1105 = vmatpush2.bf16.xpose.msra.mxu0 0
        %1106 = vmatprep.subr.bf16.mxu0 0
        %1107 = vmatpush2.bf16.xpose.msra.mxu0 0
        %1108 = vmatprep.mubr.bf16.mxu0 0
        %1109 = vmatmul.mubr.bf16.gmra.mxu0 %v1071
        %v1110 = vpop.f32.mrf.mxu0
        %v1111 = vadd.f32 0.0, %v1110
        %v1112 = vpop.f32.mrf.mxu0
        %v1113 = vpop.f32.mrf.mxu0
        %v1114 = vpop.f32.mrf.mxu0
        %1115 = vdwg.mxu0
        %v1116 = vsel %vm747, %v1111, -inf
        %1117 = vmax.xlane.f32.xlu0 %v1116
        %v1118 = vpop.xlane.xlu0 %1117
        %v1119 = vsub.f32 %v1111, %v1118
        %v1120 = vmul.f32 %v1119, 1.442695
        %v1121 = vpow.pop %v1120
        %v1122 = vsel %vm747, %v1121, 0.0
        %1123 = vadd.xlane.f32.xlu0 %v1122
        %v1124 = vpop.xlane.xlu0 %1123
        %v1125 = vrcp.pop %v1124
        %v1126 = vmul.f32 %v1121, %v1125
        %v1127 = vpack.c.bf16 %v1126, %v1126
        %s1128 = scalar_lea.vmem %s560, 8 [#allocation15]
        %1129 = vst.msk [vmem:[%s1128] sm:$0xf] %vm806, %v1127
        %1130 = vrot.lane.b32.xlu0 %v746, 112
        %v1131 = vpop.permute.xlu0 %1130
        %v1133 = vsel %vm747, %v1127, 0
        %v1136 = vsel %vm811, %v1131, 0
        %1138 = vmatprep.subr.bf16.mxu0 0
        %1139 = vmatpush1.bf16.msra.mxu0 0
        %1140 = vmatprep.subr.bf16.mxu0 0
        %1141 = vmatpush1.bf16.msra.mxu0 0
        %1142 = vmatprep.subr.bf16.mxu0 0
        %1143 = vmatpush1.bf16.msra.mxu0 0
        %1144 = vmatprep.subr.bf16.mxu0 0
        %1145 = vmatpush1.bf16.msra.mxu0 0
        %1146 = vmatprep.subr.bf16.mxu0 0
        %1147 = vmatpush1.bf16.msra.mxu0 0
        %1148 = vmatprep.subr.bf16.mxu0 0
        %1149 = vmatpush1.bf16.msra.mxu0 0
        %1150 = vmatprep.subr.bf16.mxu0 0
        %1151 = vmatpush1.bf16.msra.mxu0 0
        %1152 = vmatprep.subr.bf16.mxu0 0
        %1153 = vmatpush1.bf16.msra.mxu0 %v1136
        %1154 = vmatprep.subr.bf16.mxu0 0
        %1155 = vmatpush2.bf16.msra.mxu0 0
        %1156 = vmatprep.subr.bf16.mxu0 0
        %1157 = vmatpush2.bf16.msra.mxu0 0
        %1158 = vmatprep.subr.bf16.mxu0 0
        %1159 = vmatpush2.bf16.msra.mxu0 0
        %1160 = vmatprep.subr.bf16.mxu0 0
        %1161 = vmatpush2.bf16.msra.mxu0 0
        %1162 = vmatprep.subr.bf16.mxu0 0
        %1163 = vmatpush2.bf16.msra.mxu0 0
        %1164 = vmatprep.subr.bf16.mxu0 0
        %1165 = vmatpush2.bf16.msra.mxu0 0
        %1166 = vmatprep.subr.bf16.mxu0 0
        %1167 = vmatpush2.bf16.msra.mxu0 0
        %1168 = vmatprep.subr.bf16.mxu0 0
        %1169 = vmatpush2.bf16.msra.mxu0 0
        %1170 = vmatprep.mubr.bf16.mxu0 0
        %1171 = vmatmul.mubr.bf16.gmra.mxu0 %v1133
        %v1172 = vpop.f32.mrf.mxu0
        %v1173 = vadd.f32 0.0, %v1172
        %v1174 = vpop.f32.mrf.mxu0
        %v1175 = vpop.f32.mrf.mxu0
        %v1176 = vpop.f32.mrf.mxu0
        %1177 = vdwg.mxu0
        %v1178 = vpack.c.bf16 %v1173, %v1173
        %v1179 = vld [vmem:[#allocation13 + $0x8] sm:$0xf]
        %v1181 = vsel %vm747, %v1178, 0
        %v1184 = vsel %vm811, %v1179, 0
        %1186 = vmatprep.subr.bf16.mxu0 0
        %1187 = vmatpush1.bf16.msra.mxu0 0
        %1188 = vmatprep.subr.bf16.mxu0 0
        %1189 = vmatpush1.bf16.msra.mxu0 0
        %1190 = vmatprep.subr.bf16.mxu0 0
        %1191 = vmatpush1.bf16.msra.mxu0 0
        %1192 = vmatprep.subr.bf16.mxu0 0
        %1193 = vmatpush1.bf16.msra.mxu0 0
        %1194 = vmatprep.subr.bf16.mxu0 0
        %1195 = vmatpush1.bf16.msra.mxu0 0
        %1196 = vmatprep.subr.bf16.mxu0 0
        %1197 = vmatpush1.bf16.msra.mxu0 0
        %1198 = vmatprep.subr.bf16.mxu0 0
        %1199 = vmatpush1.bf16.msra.mxu0 0
        %1200 = vmatprep.subr.bf16.mxu0 0
        %1201 = vmatpush1.bf16.msra.mxu0 %v1184
        %1202 = vmatprep.subr.bf16.mxu0 0
        %1203 = vmatpush2.bf16.msra.mxu0 0
        %1204 = vmatprep.subr.bf16.mxu0 0
        %1205 = vmatpush2.bf16.msra.mxu0 0
        %1206 = vmatprep.subr.bf16.mxu0 0
        %1207 = vmatpush2.bf16.msra.mxu0 0
        %1208 = vmatprep.subr.bf16.mxu0 0
        %1209 = vmatpush2.bf16.msra.mxu0 0
        %1210 = vmatprep.subr.bf16.mxu0 0
        %1211 = vmatpush2.bf16.msra.mxu0 0
        %1212 = vmatprep.subr.bf16.mxu0 0
        %1213 = vmatpush2.bf16.msra.mxu0 0
        %1214 = vmatprep.subr.bf16.mxu0 0
        %1215 = vmatpush2.bf16.msra.mxu0 0
        %1216 = vmatprep.subr.bf16.mxu0 0
        %1217 = vmatpush2.bf16.msra.mxu0 0
        %1218 = vmatprep.mubr.bf16.mxu0 0
        %1219 = vmatmul.mubr.bf16.gmra.mxu0 %v1181
        %v1220 = vpop.f32.mrf.mxu0
        %v1221 = vadd.f32 0.0, %v1220
        %v1222 = vpop.f32.mrf.mxu0
        %v1223 = vpop.f32.mrf.mxu0
        %v1224 = vpop.f32.mrf.mxu0
        %1225 = vdwg.mxu0
        %v1226 = vadd.f32 %v1061, %v1221
        %1227 = vrot.lane.b32.xlu0 %v744, 104
        %v1228 = vpop.permute.xlu0 %1227
        %1229 = vrot.lane.b32.xlu0 %v745, 104
        %v1230 = vpop.permute.xlu0 %1229
        %v1232 = vsel %vm747, %v1228, 0
        %v1235 = vsel %vm747, %v1230, 0
        %1237 = vmatprep.subr.bf16.mxu0 0
        %1238 = vmatpush1.bf16.xpose.msra.mxu0 0
        %1239 = vmatprep.subr.bf16.mxu0 0
        %1240 = vmatpush1.bf16.xpose.msra.mxu0 0
        %1241 = vmatprep.subr.bf16.mxu0 0
        %1242 = vmatpush1.bf16.xpose.msra.mxu0 0
        %1243 = vmatprep.subr.bf16.mxu0 0
        %1244 = vmatpush1.bf16.xpose.msra.mxu0 0
        %1245 = vmatprep.subr.bf16.mxu0 0
        %1246 = vmatpush1.bf16.xpose.msra.mxu0 0
        %1247 = vmatprep.subr.bf16.mxu0 0
        %1248 = vmatpush1.bf16.xpose.msra.mxu0 0
        %1249 = vmatprep.subr.bf16.mxu0 0
        %1250 = vmatpush1.bf16.xpose.msra.mxu0 0
        %1251 = vmatprep.subr.bf16.mxu0 0
        %1252 = vmatpush1.bf16.xpose.msra.mxu0 %v1235
        %1253 = vmatprep.subr.bf16.mxu0 0
        %1254 = vmatpush2.bf16.xpose.msra.mxu0 0
        %1255 = vmatprep.subr.bf16.mxu0 0
        %1256 = vmatpush2.bf16.xpose.msra.mxu0 0
        %1257 = vmatprep.subr.bf16.mxu0 0
        %1258 = vmatpush2.bf16.xpose.msra.mxu0 0
        %1259 = vmatprep.subr.bf16.mxu0 0
        %1260 = vmatpush2.bf16.xpose.msra.mxu0 0
        %1261 = vmatprep.subr.bf16.mxu0 0
        %1262 = vmatpush2.bf16.xpose.msra.mxu0 0
        %1263 = vmatprep.subr.bf16.mxu0 0
        %1264 = vmatpush2.bf16.xpose.msra.mxu0 0
        %1265 = vmatprep.subr.bf16.mxu0 0
        %1266 = vmatpush2.bf16.xpose.msra.mxu0 0
        %1267 = vmatprep.subr.bf16.mxu0 0
        %1268 = vmatpush2.bf16.xpose.msra.mxu0 0
        %1269 = vmatprep.mubr.bf16.mxu0 0
        %1270 = vmatmul.mubr.bf16.gmra.mxu0 %v1232
        %v1271 = vpop.f32.mrf.mxu0
        %v1272 = vadd.f32 0.0, %v1271
        %v1273 = vpop.f32.mrf.mxu0
        %v1274 = vpop.f32.mrf.mxu0
        %v1275 = vpop.f32.mrf.mxu0
        %1276 = vdwg.mxu0
        %v1277 = vsel %vm747, %v1272, -inf
        %1278 = vmax.xlane.f32.xlu0 %v1277
        %v1279 = vpop.xlane.xlu0 %1278
        %v1280 = vsub.f32 %v1272, %v1279
        %v1281 = vmul.f32 %v1280, 1.442695
        %v1282 = vpow.pop %v1281
        %v1283 = vsel %vm747, %v1282, 0.0
        %1284 = vadd.xlane.f32.xlu0 %v1283
        %v1285 = vpop.xlane.xlu0 %1284
        %v1286 = vrcp.pop %v1285
        %v1287 = vmul.f32 %v1282, %v1286
        %v1288 = vpack.c.bf16 %v1287, %v1287
        %s1289 = scalar_lea.vmem %s560, 12 [#allocation15]
        %1290 = vst.msk [vmem:[%s1289] sm:$0xf] %vm806, %v1288
        %1291 = vrot.lane.b32.xlu0 %v746, 104
        %v1292 = vpop.permute.xlu0 %1291
        %v1294 = vsel %vm747, %v1288, 0
        %v1297 = vsel %vm811, %v1292, 0
        %1299 = vmatprep.subr.bf16.mxu0 0
        %1300 = vmatpush1.bf16.msra.mxu0 0
        %1301 = vmatprep.subr.bf16.mxu0 0
        %1302 = vmatpush1.bf16.msra.mxu0 0
        %1303 = vmatprep.subr.bf16.mxu0 0
        %1304 = vmatpush1.bf16.msra.mxu0 0
        %1305 = vmatprep.subr.bf16.mxu0 0
        %1306 = vmatpush1.bf16.msra.mxu0 0
        %1307 = vmatprep.subr.bf16.mxu0 0
        %1308 = vmatpush1.bf16.msra.mxu0 0
        %1309 = vmatprep.subr.bf16.mxu0 0
        %1310 = vmatpush1.bf16.msra.mxu0 0
        %1311 = vmatprep.subr.bf16.mxu0 0
        %1312 = vmatpush1.bf16.msra.mxu0 0
        %1313 = vmatprep.subr.bf16.mxu0 0
        %1314 = vmatpush1.bf16.msra.mxu0 %v1297
        %1315 = vmatprep.subr.bf16.mxu0 0
        %1316 = vmatpush2.bf16.msra.mxu0 0
        %1317 = vmatprep.subr.bf16.mxu0 0
        %1318 = vmatpush2.bf16.msra.mxu0 0
        %1319 = vmatprep.subr.bf16.mxu0 0
        %1320 = vmatpush2.bf16.msra.mxu0 0
        %1321 = vmatprep.subr.bf16.mxu0 0
        %1322 = vmatpush2.bf16.msra.mxu0 0
        %1323 = vmatprep.subr.bf16.mxu0 0
        %1324 = vmatpush2.bf16.msra.mxu0 0
        %1325 = vmatprep.subr.bf16.mxu0 0
        %1326 = vmatpush2.bf16.msra.mxu0 0
        %1327 = vmatprep.subr.bf16.mxu0 0
        %1328 = vmatpush2.bf16.msra.mxu0 0
        %1329 = vmatprep.subr.bf16.mxu0 0
        %1330 = vmatpush2.bf16.msra.mxu0 0
        %1331 = vmatprep.mubr.bf16.mxu0 0
        %1332 = vmatmul.mubr.bf16.gmra.mxu0 %v1294
        %v1333 = vpop.f32.mrf.mxu0
        %v1334 = vadd.f32 0.0, %v1333
        %v1335 = vpop.f32.mrf.mxu0
        %v1336 = vpop.f32.mrf.mxu0
        %v1337 = vpop.f32.mrf.mxu0
        %1338 = vdwg.mxu0
        %v1339 = vpack.c.bf16 %v1334, %v1334
        %v1340 = vld [vmem:[#allocation13 + $0xc] sm:$0xf]
        %v1342 = vsel %vm747, %v1339, 0
        %v1345 = vsel %vm811, %v1340, 0
        %1347 = vmatprep.subr.bf16.mxu0 0
        %1348 = vmatpush1.bf16.msra.mxu0 0
        %1349 = vmatprep.subr.bf16.mxu0 0
        %1350 = vmatpush1.bf16.msra.mxu0 0
        %1351 = vmatprep.subr.bf16.mxu0 0
        %1352 = vmatpush1.bf16.msra.mxu0 0
        %1353 = vmatprep.subr.bf16.mxu0 0
        %1354 = vmatpush1.bf16.msra.mxu0 0
        %1355 = vmatprep.subr.bf16.mxu0 0
        %1356 = vmatpush1.bf16.msra.mxu0 0
        %1357 = vmatprep.subr.bf16.mxu0 0
        %1358 = vmatpush1.bf16.msra.mxu0 0
        %1359 = vmatprep.subr.bf16.mxu0 0
        %1360 = vmatpush1.bf16.msra.mxu0 0
        %1361 = vmatprep.subr.bf16.mxu0 0
        %1362 = vmatpush1.bf16.msra.mxu0 %v1345
        %1363 = vmatprep.subr.bf16.mxu0 0
        %1364 = vmatpush2.bf16.msra.mxu0 0
        %1365 = vmatprep.subr.bf16.mxu0 0
        %1366 = vmatpush2.bf16.msra.mxu0 0
        %1367 = vmatprep.subr.bf16.mxu0 0
        %1368 = vmatpush2.bf16.msra.mxu0 0
        %1369 = vmatprep.subr.bf16.mxu0 0
        %1370 = vmatpush2.bf16.msra.mxu0 0
        %1371 = vmatprep.subr.bf16.mxu0 0
        %1372 = vmatpush2.bf16.msra.mxu0 0
        %1373 = vmatprep.subr.bf16.mxu0 0
        %1374 = vmatpush2.bf16.msra.mxu0 0
        %1375 = vmatprep.subr.bf16.mxu0 0
        %1376 = vmatpush2.bf16.msra.mxu0 0
        %1377 = vmatprep.subr.bf16.mxu0 0
        %1378 = vmatpush2.bf16.msra.mxu0 0
        %1379 = vmatprep.mubr.bf16.mxu0 0
        %1380 = vmatmul.mubr.bf16.gmra.mxu0 %v1342
        %v1381 = vpop.f32.mrf.mxu0
        %v1382 = vadd.f32 0.0, %v1381
        %v1383 = vpop.f32.mrf.mxu0
        %v1384 = vpop.f32.mrf.mxu0
        %v1385 = vpop.f32.mrf.mxu0
        %1386 = vdwg.mxu0
        %v1387 = vadd.f32 %v1226, %v1382
        %v1388 = vadd.f32 %v562, %v1387
        %v1389 = vld [vmem:[%s7] sm:$0x1]
        %v1391 = vlaneseq
        %v1392 = vshrl.u32 %v1391, 7
        %v1393 = vsub.s32 0, %v1392
        %v1394 = vrot.slane %v1389, %v1393
        %v1396 = vadd.f32 %v1388, %v1394
        %v1397 = vsel %vm582, %v1396, 0.0
        %1398 = vadd.xlane.f32.xlu0 %v1397
        %v1399 = vpop.xlane.xlu0 %1398
        %v1400 = vrcp.pop 32.0
        %v1401 = vmul.f32 %v1399, %v1400
        %v1402 = vsub.f32 %v1396, %v1401
        %v1403 = vmul.f32 %v1402, %v1402
        %v1404 = vsel %vm582, %v1403, 0.0
        %1405 = vadd.xlane.f32.xlu0 %v1404
        %v1406 = vpop.xlane.xlu0 %1405
        %v1407 = vrcp.pop 31.0
        %v1408 = vmul.f32 %v1406, %v1407
        %v1409 = vrsqrt.pop %v1408
        %v1410 = vmul.f32 %v1408, %v1409
        %vm1411 = vcmp.eq.f32.partialorder %v1408, inf
        %v1412 = vsel %vm1411, %v1408, %v1410
        %vm1413 = vcmp.eq.f32.partialorder %v1408, 0.0
        %v1414 = vand.u32 %v1408, 2147483648
        %v1415 = vsel %vm1413, %v1414, %v1412
        %v1416 = vadd.f32 %v1415, 0.001
        %v1417 = vrcp.pop %v1416
        %v1418 = vld [vmem:[%s8] sm:$0x1]
        %v1419 = vmul.f32 %v1402, %v1417
        %v1421 = vlaneseq
        %v1422 = vshrl.u32 %v1421, 7
        %v1423 = vsub.s32 0, %v1422
        %v1424 = vrot.slane %v1418, %v1423
        %v1426 = vmul.f32 %v1424, %v1419
        %v1427 = vld [vmem:[%s9] sm:$0x1]
        %v1429 = vlaneseq
        %v1430 = vshrl.u32 %v1429, 7
        %v1431 = vsub.s32 0, %v1430
        %v1432 = vrot.slane %v1427, %v1431
        %v1434 = vadd.f32 %v1426, %v1432
        %1435 = vst.msk [vmem:[%s553] sm:$0xff] %vm582, %v1434
        %s1436 = sand.u32 %s286, 1
        %s1437 = scalar_lea.sflag [#allocation4], %s1436
        %s1438 = sand.u32 %s286, 1
        %s1439 = smul.addr %s1438, 8
        %s1440 = scalar_lea.vmem [#allocation14], %s1439
        %s1441 = sand.u32 %s314, 1
        %s1442 = scalar_lea.sflag [#allocation16], %s1441
        %s1443 = sand.u32 %s314, 1
        %s1444 = smul.addr %s1443, 16
        %s1445 = scalar_lea.vmem [#allocation15], %s1444
        // Predicated region
        $region89: #{tpu_custom_call.1} parent=59 // pred_check
          %p1446 = pneg %p296
        $region90: #{tpu_custom_call.1} parent=59 // pred_check_branch
          %1448 = sbr.rel (%p1446) target = $region92
        $region91: #{tpu_custom_call.1} parent=59 // pred_region
          %s1450 = ssub.s32 128, 128
          %1451 = vsyncadd %s1437, %s1450
          %s1452 = sadd.s32 %s42, %s41
          %s1453 = smul.addr %s1452, 128
          %s1454 = scalar_lea.hbm %s10, %s1453
          %s1456 = sshll.u32 %s1440, 4
          %s1457 = int_to_ptr.vmem [resolvable:$true] %s1456
          %1459 = dma.vmem_to_hbm [thread:$0]  %s1457, 128, %s1454, %s1437
        $region92: #{tpu_custom_call.1} parent=59 // pred_fallthru
          _
        // Predicated region
        $region93: #{tpu_custom_call.1} parent=59 // pred_check
          %p1460 = pneg %p324
        $region94: #{tpu_custom_call.1} parent=59 // pred_check_branch
          %1462 = sbr.rel (%p1460) target = $region96
        $region95: #{tpu_custom_call.1} parent=59 // pred_region
          %s1464 = ssub.s32 256, 256
          %1465 = vsyncadd %s1442, %s1464
          %s1466 = sadd.s32 %s42, %s41
          %s1467 = smul.addr %s1466, 64
          %s1468 = scalar_lea.hbm %s11, %s1467
          %s1469 = sshll.u32 %s1445, 4
          %s1470 = int_to_ptr.vmem [resolvable:$true] %s1469
          %1475 = dma.vmem_to_hbm [thread:$0]  %s1470, 256, %s1468, %s1442, 64, 128, 4
        $region96: #{tpu_custom_call.1} parent=59 // pred_fallthru
          _
      $region60: #{tpu_custom_call.1} parent=5 // pred_fallthru
        _
      %p1476 = scmp.le.s32.totalorder 2, %s32
      // Predicated region
      $region97: #{tpu_custom_call.1} parent=5 // pred_check
        %p1477 = pneg %p1476
      $region98: #{tpu_custom_call.1} parent=5 // pred_check_branch
        %1479 = sbr.rel (%p1477) target = $region100
      $region99: #{tpu_custom_call.1} parent=5 // pred_region
        %s1480 = ssub.s32 %s32, 2
        // Predicated region
        $region101: #{tpu_custom_call.1} parent=99 // pred_check
          %p1481 = pneg %p302
        $region102: #{tpu_custom_call.1} parent=99 // pred_check_branch
          %1483 = sbr.rel (%p1481) target = $region104
        $region103: #{tpu_custom_call.1} parent=99 // pred_region
          %s1484 = sand.u32 %s287, 1
          %s1485 = scalar_lea.sflag [#allocation4], %s1484
          %s1486 = sand.u32 %s287, 1
          %s1487 = smul.addr %s1486, 8
          %s1488 = scalar_lea.vmem [#allocation14], %s1487
          %1489 = dma.done %s1485, 128
        $region104: #{tpu_custom_call.1} parent=99 // pred_fallthru
          _
        // Predicated region
        $region105: #{tpu_custom_call.1} parent=99 // pred_check
          %p1490 = pneg %p330
        $region106: #{tpu_custom_call.1} parent=99 // pred_check_branch
          %1492 = sbr.rel (%p1490) target = $region108
        $region107: #{tpu_custom_call.1} parent=99 // pred_region
          %s1493 = sand.u32 %s315, 1
          %s1494 = scalar_lea.sflag [#allocation16], %s1493
          %s1495 = sand.u32 %s315, 1
          %s1496 = smul.addr %s1495, 16
          %s1497 = scalar_lea.vmem [#allocation15], %s1496
          %1498 = dma.done %s1494, 256
        $region108: #{tpu_custom_call.1} parent=99 // pred_fallthru
          _
      $region100: #{tpu_custom_call.1} parent=5 // pred_fallthru
        _
    $region6: #{tpu_custom_call.1} parent=1 // loop_footer
      %s36 = sadd.s32 1, %s32
    $region7: #{tpu_custom_call.1} parent=1 // loop_footer_branch
      %31 = sbr.rel target = $region3
    $region8: #{tpu_custom_call.1} parent=1 // loop_exit
      _
    %1499 = vsyncpa [#allocation3], 1
    %s1500 = scalar_lea.sflag [#allocation3], 1
    %1501 = vsyncpa %s1500, 1
    %1502 = vsyncpa [#allocation6], 1
    %s1503 = scalar_lea.sflag [#allocation6], 1
    %1504 = vsyncpa %s1503, 1
    %1505 = vsyncpa [#allocation9], 1
    %1506 = vsyncpa [#allocation12], 1
    %1507 = vsyncpa [#allocation4], 1
    %s1508 = scalar_lea.sflag [#allocation4], 1
    %1509 = vsyncpa %s1508, 1
    %1510 = vsyncpa [#allocation16], 1
    %s1511 = scalar_lea.sflag [#allocation16], 1
    %1512 = vsyncpa %s1511, 1

</llo_original>
